<compile_context>
chip_gen: v7x
topology: tpu7x:2x2x1
jax: 0.10.0
libtpu: 0.0.40
codegen_flags: <defaults>
</compile_context>

<pallas_src>
import jax
import jax.numpy as jnp
from jax.experimental import pallas as pl
from jax.experimental.pallas import tpu as pltpu

LANE = 128


def _rup(x, m):
    return ((x + m - 1) // m) * m


# ---------------------------------------------------------------------------
# Fused kernel: s_embed_net -> {q_net, eta_net, w_net} on one batch tile.
# ---------------------------------------------------------------------------
def _make_fused_kernel(n_s, n_q, n_e, n_w, compute_dtype):
    n_params = 2 * n_s + (2 * n_q + 1) + (2 * n_e + 1) + 2 * n_w

    def kernel(x_ref, ae_ref, scale_ref, *rest):
        p = rest[:n_params]
        q_out_ref, eta_out_ref, w_out_ref = rest[n_params:]

        def dot(act, w_ref):
            # bf16 (optional) MXU inputs, f32 accumulation.
            return jnp.dot(act.astype(compute_dtype), w_ref[...],
                           preferred_element_type=jnp.float32)

        idx = 0

        # ---- s_embed_net (shared by the q/eta heads and the w head) ----
        h = x_ref[...]
        for i in range(n_s):
            h = dot(h, p[idx]) + p[idx + 1][...]
            idx += 2
            if i < n_s - 1:               # hidden layers: ReLU
                h = jnp.maximum(h, 0.0)
        s_emb = h                          # FFNet output layer is linear
        ae = ae_ref[...]                   # gathered a_embed rows (padded)

        def head_with_concat(idx, n_layers):
            # concat([s_emb, a_emb]) @ W0  ==  s_emb @ W0_s + ae @ W0_a
            hh = dot(s_emb, p[idx]) + dot(ae, p[idx + 1]) + p[idx + 2][...]
            idx += 3
            if n_layers > 1:
                hh = jnp.maximum(hh, 0.0)
            for i in range(1, n_layers):
                hh = dot(hh, p[idx]) + p[idx + 1][...]
                idx += 2
                if i < n_layers - 1:
                    hh = jnp.maximum(hh, 0.0)
            return hh, idx

        # ---- q_net (q and v share it; rows [0:B) -> q, [B:2B) -> v) ----
        hq, idx = head_with_concat(idx, n_q)
        q_out_ref[...] = jnp.abs(hq) * scale_ref[0, 0]      # pos_head * q_scale

        # ---- eta_net ----
        he, idx = head_with_concat(idx, n_e)
        eta_out_ref[...] = jnp.abs(he)

        # ---- w_net (input: s_emb) ----
        hw = s_emb
        for i in range(n_w):
            hw = dot(hw, p[idx]) + p[idx + 1][...]
            idx += 2
            if i < n_w - 1:
                hw = jnp.maximum(hw, 0.0)
        w_out_ref[...] = jnp.abs(hw)

    return kernel


# ---------------------------------------------------------------------------
# Parameter prep: pad every feature dim to 128 lanes, split the first q/eta
# layer into its s_embed / a_embed halves (replaces the concat), flatten into
# the argument order the kernel consumes.
# ---------------------------------------------------------------------------
def prepare_params(params, compute_dtype=jnp.float32):
    def pad_w(w):
        r, c = w.shape
        return jnp.pad(w, ((0, _rup(r, LANE) - r),
                           (0, _rup(c, LANE) - c))).astype(compute_dtype)

    def pad_b(b):
        c = b.shape[1]
        return jnp.pad(b, ((0, 0), (0, _rup(c, LANE) - c))).astype(jnp.float32)

    s_layers = params["s_embed_net"]
    q_layers = params["q_net"]
    e_layers = params["eta_net"]
    w_layers = params["w_net"]
    s_embed_dim = s_layers[-1][0].shape[1]

    flat = []
    for w, b in s_layers:
        flat += [pad_w(w), pad_b(b)]
    for layers in (q_layers, e_layers):
        w0, b0 = layers[0]
        flat += [pad_w(w0[:s_embed_dim]), pad_w(w0[s_embed_dim:]), pad_b(b0)]
        for w, b in layers[1:]:
            flat += [pad_w(w), pad_b(b)]
    for w, b in w_layers:
        flat += [pad_w(w), pad_b(b)]

    a_embed = params["a_embed"].astype(jnp.float32)
    a_pad = _rup(a_embed.shape[1], LANE)
    return {
        "flat": flat,
        "a_embed_pad": jnp.pad(a_embed, ((0, 0), (0, a_pad - a_embed.shape[1]))),
        "scale": params["q_scale"].reshape(1, 1).astype(jnp.float32),
        "n_s": len(s_layers), "n_q": len(q_layers),
        "n_e": len(e_layers), "n_w": len(w_layers),
        "s_pad": _rup(s_layers[0][0].shape[0], LANE),
        "compute_dtype": compute_dtype,
    }


# ---------------------------------------------------------------------------
# One pallas_call over a batch grid computing all three heads.
# ---------------------------------------------------------------------------
def fused_forward(pp, x, a_idx, *, tb_max=512):
    """x: (N, s_dim) f32 states (rows = [s; ss] when v is needed);
    a_idx: (N,) int32 action indices (rows = [a; pi_ss]).
    Returns (q_all, eta_all, w_all), each (N, 1) f32 (q_all already scaled)."""
    n, s_dim = x.shape
    s_pad = pp["s_pad"]
    a_pad = pp["a_embed_pad"].shape[1]
    head_pad = _rup(1, LANE)

    tb = min(tb_max, _rup(n, 8))          # sublane-friendly batch tile
    n_pad = _rup(n, tb)

    x_p = jnp.pad(x.astype(jnp.float32),
                  ((0, n_pad - n), (0, s_pad - s_dim)))
    a_idx_p = jnp.pad(a_idx.astype(jnp.int32), (0, n_pad - n))
    ae_p = pp["a_embed_pad"][a_idx_p]      # embedding gather done in JAX (glue)

    flat = pp["flat"]
    kernel = _make_fused_kernel(pp["n_s"], pp["n_q"], pp["n_e"], pp["n_w"],
                                pp["compute_dtype"])

    in_specs = (
        [pl.BlockSpec((tb, s_pad), lambda i: (i, 0)),        # streamed rows
         pl.BlockSpec((tb, a_pad), lambda i: (i, 0)),        # streamed a_embed
         pl.BlockSpec(memory_space=pltpu.MemorySpace.SMEM)]  # q_scale scalar
        + [pl.BlockSpec(w.shape, lambda i: (0, 0)) for w in flat]  # resident
    )
    out_spec = pl.BlockSpec((tb, head_pad), lambda i: (i, 0))
    out_shape = jax.ShapeDtypeStruct((n_pad, head_pad), jnp.float32)

    q_all, eta_all, w_all = pl.pallas_call(
        kernel,
        grid=(n_pad // tb,),
        in_specs=in_specs,
        out_specs=(out_spec, out_spec, out_spec),
        out_shape=(out_shape, out_shape, out_shape),
        compiler_params=pltpu.CompilerParams(
            dimension_semantics=("parallel",)),   # megacore / 2-TC sharding
    )(x_p, ae_p, pp["scale"], *flat)

    return q_all[:n, 0:1], eta_all[:n, 0:1], w_all[:n, 0:1]


# ---------------------------------------------------------------------------
# forward() mirroring FFLargeANuisanceModule.forward
# ---------------------------------------------------------------------------
def forward(pp, s, a=None, ss=None, pi_ss=None,
            calc_q=False, calc_v=False, calc_eta=False, calc_w=False):
    if not (calc_q or calc_v or calc_eta or calc_w):
        return None, None, None, None
    if calc_q or calc_eta:
        assert a is not None
    b = s.shape[0]
    a_s = a if a is not None else jnp.zeros((b,), jnp.int32)
    if calc_v:
        assert ss is not None and pi_ss is not None
        x = jnp.concatenate([s, ss], axis=0)          # batch q with v
        a_idx = jnp.concatenate([a_s, pi_ss], axis=0)
    else:
        x = s
        a_idx = a_s

    q_all, eta_all, w_all = fused_forward(pp, x, a_idx)

    q = q_all[:b] if calc_q else None
    v = q_all[b:2 * b] if calc_v else None
    eta = eta_all[:b] if calc_eta else None
    w = w_all[:b] if calc_w else None
    return q, v, eta, w


# ---------------------------------------------------------------------------
# Deterministic parameter construction (shapes follow the nn.Module __init__)
# ---------------------------------------------------------------------------
def _init_linear(key, in_dim, out_dim):
    kw, kb = jax.random.split(key)
    bound = 1.0 / jnp.sqrt(jnp.float32(in_dim))
    w = jax.random.uniform(kw, (in_dim, out_dim), jnp.float32, -bound, bound)
    b = jax.random.uniform(kb, (1, out_dim), jnp.float32, -bound, bound)
    return w, b


def _init_ffnet(key, input_dim, output_dim, layer_sizes):
    dims = [input_dim] + list(layer_sizes) + [output_dim]
    keys = jax.random.split(key, len(dims) - 1)
    return [_init_linear(k, dims[i], dims[i + 1]) for i, k in enumerate(keys)]


def init_model(key, s_dim, num_a, gamma, config):
    k_a, k_s, k_q, k_e, k_w = jax.random.split(key, 5)
    sa_input_dim = config["s_embed_dim"] + config["a_embed_dim"]
    return {
        "q_scale": jnp.full((1, 1), 1.0 / (1.0 - gamma), jnp.float32),
        "a_embed": jax.random.normal(
            k_a, (num_a, config["a_embed_dim"]), jnp.float32),
        "s_embed_net": _init_ffnet(
            k_s, s_dim, config["s_embed_dim"], config["s_embed_layers"]),
        "q_net": _init_ffnet(k_q, sa_input_dim, 1, config["q_layers"]),
        "eta_net": _init_ffnet(k_e, sa_input_dim, 1, config["eta_layers"]),
        "w_net": _init_ffnet(k_w, config["s_embed_dim"], 1, config["w_layers"]),
    }


# ---------------------------------------------------------------------------
# Plain-JAX reference (sanity check)
# ---------------------------------------------------------------------------
def _ref_mlp(x, layers, apply_abs=False, scale=None):
    h = x
    for i, (wt, b) in enumerate(layers):
        h = h @ wt + b
        if i < len(layers) - 1:
            h = jnp.maximum(h, 0.0)
    if apply_abs:
        h = jnp.abs(h)
    if scale is not None:
        h = h * scale[0, 0]
    return h


if __name__ == "__main__":
    s_dim = 8
    num_a = 10
    gamma = 0.9
    config = {
        "s_embed_dim": 16,
        "a_embed_dim": 8,
        "s_embed_layers": [32, 32],
        "q_layers": [32, 32],
        "eta_layers": [32],
        "w_layers": [32],
    }

    key = jax.random.PRNGKey(0)
    k_params, k_s, k_a, k_ss, k_pi = jax.random.split(key, 5)
    params = init_model(k_params, s_dim, num_a, gamma, config)
    # f32 compute to match the PyTorch module exactly.
    # TODO(synk): pass compute_dtype=jnp.bfloat16 for v6e/v7x large-batch
    # throughput (f32 MXU accumulation is kept).
    prepped = prepare_params(params, compute_dtype=jnp.float32)

    batch = 8
    s = jax.random.normal(k_s, (batch, s_dim), jnp.float32)
    a = jax.random.randint(k_a, (batch,), 0, num_a)
    ss = jax.random.normal(k_ss, (batch, s_dim), jnp.float32)
    pi_ss = jax.random.randint(k_pi, (batch,), 0, num_a)

    fwd = jax.jit(lambda s_, a_, ss_, pi_: forward(
        prepped, s_, a=a_, ss=ss_, pi_ss=pi_,
        calc_q=True, calc_v=True, calc_eta=True, calc_w=True))
    q, v, eta, w = fwd(s, a, ss, pi_ss)
    jax.block_until_ready((q, v, eta, w))

    # Correctness check against a plain-JAX reference of the original module.
    s_emb_ref = _ref_mlp(s, params["s_embed_net"])
    sa_ref = jnp.concatenate([s_emb_ref, params["a_embed"][a]], axis=1)
    ss_emb_ref = _ref_mlp(ss, params["s_embed_net"])
    ssa_ref = jnp.concatenate([ss_emb_ref, params["a_embed"][pi_ss]], axis=1)
    q_ref = _ref_mlp(sa_ref, params["q_net"], True, params["q_scale"])
    v_ref = _ref_mlp(ssa_ref, params["q_net"], True, params["q_scale"])
    eta_ref = _ref_mlp(sa_ref, params["eta_net"], True)
    w_ref = _ref_mlp(s_emb_ref, params["w_net"], True)

    assert q.shape == (batch, 1) and v.shape == (batch, 1)
    assert eta.shape == (batch, 1) and w.shape == (batch, 1)
    assert jnp.allclose(q, q_ref, atol=1e-4, rtol=1e-4), "q mismatch"
    assert jnp.allclose(v, v_ref, atol=1e-4, rtol=1e-4), "v mismatch"
    assert jnp.allclose(eta, eta_ref, atol=1e-4, rtol=1e-4), "eta mismatch"
    assert jnp.allclose(w, w_ref, atol=1e-4, rtol=1e-4), "w mismatch"

    print("KERNEL_OK")
</pallas_src>

<mosaic_0001>
module attributes {stable_mosaic.version = 11 : i64} {
  func.func @kernel(%arg0: i32, %arg1: memref<16x128xf32, #tpu.memory_space<vmem>>, %arg2: memref<16x128xf32, #tpu.memory_space<vmem>>, %arg3: memref<1x1xf32, #tpu.memory_space<smem>>, %arg4: memref<128x128xf32, #tpu.memory_space<vmem>>, %arg5: memref<1x128xf32, #tpu.memory_space<vmem>>, %arg6: memref<128x128xf32, #tpu.memory_space<vmem>>, %arg7: memref<1x128xf32, #tpu.memory_space<vmem>>, %arg8: memref<128x128xf32, #tpu.memory_space<vmem>>, %arg9: memref<1x128xf32, #tpu.memory_space<vmem>>, %arg10: memref<128x128xf32, #tpu.memory_space<vmem>>, %arg11: memref<128x128xf32, #tpu.memory_space<vmem>>, %arg12: memref<1x128xf32, #tpu.memory_space<vmem>>, %arg13: memref<128x128xf32, #tpu.memory_space<vmem>>, %arg14: memref<1x128xf32, #tpu.memory_space<vmem>>, %arg15: memref<128x128xf32, #tpu.memory_space<vmem>>, %arg16: memref<1x128xf32, #tpu.memory_space<vmem>>, %arg17: memref<128x128xf32, #tpu.memory_space<vmem>>, %arg18: memref<128x128xf32, #tpu.memory_space<vmem>>, %arg19: memref<1x128xf32, #tpu.memory_space<vmem>>, %arg20: memref<128x128xf32, #tpu.memory_space<vmem>>, %arg21: memref<1x128xf32, #tpu.memory_space<vmem>>, %arg22: memref<128x128xf32, #tpu.memory_space<vmem>>, %arg23: memref<1x128xf32, #tpu.memory_space<vmem>>, %arg24: memref<128x128xf32, #tpu.memory_space<vmem>>, %arg25: memref<1x128xf32, #tpu.memory_space<vmem>>, %arg26: memref<16x128xf32, #tpu.memory_space<vmem>>, %arg27: memref<16x128xf32, #tpu.memory_space<vmem>>, %arg28: memref<16x128xf32, #tpu.memory_space<vmem>>) attributes {dimension_semantics = [#tpu.dimension_semantics<parallel>], iteration_bounds = array<i64: 1>, scalar_prefetch = 0 : i64, scratch_operands = 0 : i64, tpu.core_type = #tpu.core_type<tc>, window_params = [{transform_indices = @transform_0, window_bounds = array<i64: 16, 128>}, {transform_indices = @transform_1, window_bounds = array<i64: 16, 128>}, {transform_indices = @transform_2, window_bounds = array<i64: 1, 1>}, {pipeline_mode = #tpu.pipeline_mode<synchronous>, transform_indices = @transform_3, window_bounds = array<i64: 128, 128>}, {pipeline_mode = #tpu.pipeline_mode<synchronous>, transform_indices = @transform_4, window_bounds = array<i64: 1, 128>}, {pipeline_mode = #tpu.pipeline_mode<synchronous>, transform_indices = @transform_5, window_bounds = array<i64: 128, 128>}, {pipeline_mode = #tpu.pipeline_mode<synchronous>, transform_indices = @transform_6, window_bounds = array<i64: 1, 128>}, {pipeline_mode = #tpu.pipeline_mode<synchronous>, transform_indices = @transform_7, window_bounds = array<i64: 128, 128>}, {pipeline_mode = #tpu.pipeline_mode<synchronous>, transform_indices = @transform_8, window_bounds = array<i64: 1, 128>}, {pipeline_mode = #tpu.pipeline_mode<synchronous>, transform_indices = @transform_9, window_bounds = array<i64: 128, 128>}, {pipeline_mode = #tpu.pipeline_mode<synchronous>, transform_indices = @transform_10, window_bounds = array<i64: 128, 128>}, {pipeline_mode = #tpu.pipeline_mode<synchronous>, transform_indices = @transform_11, window_bounds = array<i64: 1, 128>}, {pipeline_mode = #tpu.pipeline_mode<synchronous>, transform_indices = @transform_12, window_bounds = array<i64: 128, 128>}, {pipeline_mode = #tpu.pipeline_mode<synchronous>, transform_indices = @transform_13, window_bounds = array<i64: 1, 128>}, {pipeline_mode = #tpu.pipeline_mode<synchronous>, transform_indices = @transform_14, window_bounds = array<i64: 128, 128>}, {pipeline_mode = #tpu.pipeline_mode<synchronous>, transform_indices = @transform_15, window_bounds = array<i64: 1, 128>}, {pipeline_mode = #tpu.pipeline_mode<synchronous>, transform_indices = @transform_16, window_bounds = array<i64: 128, 128>}, {pipeline_mode = #tpu.pipeline_mode<synchronous>, transform_indices = @transform_17, window_bounds = array<i64: 128, 128>}, {pipeline_mode = #tpu.pipeline_mode<synchronous>, transform_indices = @transform_18, window_bounds = array<i64: 1, 128>}, {pipeline_mode = #tpu.pipeline_mode<synchronous>, transform_indices = @transform_19, window_bounds = array<i64: 128, 128>}, {pipeline_mode = #tpu.pipeline_mode<synchronous>, transform_indices = @transform_20, window_bounds = array<i64: 1, 128>}, {pipeline_mode = #tpu.pipeline_mode<synchronous>, transform_indices = @transform_21, window_bounds = array<i64: 128, 128>}, {pipeline_mode = #tpu.pipeline_mode<synchronous>, transform_indices = @transform_22, window_bounds = array<i64: 1, 128>}, {pipeline_mode = #tpu.pipeline_mode<synchronous>, transform_indices = @transform_23, window_bounds = array<i64: 128, 128>}, {pipeline_mode = #tpu.pipeline_mode<synchronous>, transform_indices = @transform_24, window_bounds = array<i64: 1, 128>}, {transform_indices = @transform_25, window_bounds = array<i64: 16, 128>}, {transform_indices = @transform_26, window_bounds = array<i64: 16, 128>}, {transform_indices = @transform_27, window_bounds = array<i64: 16, 128>}]} {
    %c0 = arith.constant 0 : index
    %c0_0 = arith.constant 0 : index
    %0 = vector.load %arg1[%c0, %c0_0] : memref<16x128xf32, #tpu.memory_space<vmem>>, vector<16x128xf32>
    %c0_1 = arith.constant 0 : index
    %c0_2 = arith.constant 0 : index
    %1 = vector.load %arg4[%c0_1, %c0_2] : memref<128x128xf32, #tpu.memory_space<vmem>>, vector<128x128xf32>
    %cst = arith.constant dense<0.000000e+00> : vector<16x128xf32>
    %2 = tpu.matmul %0, %1, %cst {dimension_numbers = #tpu.dot_dimension_numbers<[1], [0], [0], [1], [0, 0, 1, 1], [], []>} : vector<16x128xf32>, vector<128x128xf32>, vector<16x128xf32> -> vector<16x128xf32>
    %c0_3 = arith.constant 0 : index
    %c0_4 = arith.constant 0 : index
    %3 = vector.load %arg5[%c0_3, %c0_4] : memref<1x128xf32, #tpu.memory_space<vmem>>, vector<1x128xf32>
    %4 = vector.broadcast %3 : vector<1x128xf32> to vector<16x128xf32>
    %5 = arith.addf %2, %4 : vector<16x128xf32>
    %cst_5 = arith.constant 0.000000e+00 : f32
    %6 = vector.broadcast %cst_5 : f32 to vector<16x128xf32>
    %7 = arith.maximumf %5, %6 : vector<16x128xf32>
    %c0_6 = arith.constant 0 : index
    %c0_7 = arith.constant 0 : index
    %8 = vector.load %arg6[%c0_6, %c0_7] : memref<128x128xf32, #tpu.memory_space<vmem>>, vector<128x128xf32>
    %cst_8 = arith.constant dense<0.000000e+00> : vector<16x128xf32>
    %9 = tpu.matmul %7, %8, %cst_8 {dimension_numbers = #tpu.dot_dimension_numbers<[1], [0], [0], [1], [0, 0, 1, 1], [], []>} : vector<16x128xf32>, vector<128x128xf32>, vector<16x128xf32> -> vector<16x128xf32>
    %c0_9 = arith.constant 0 : index
    %c0_10 = arith.constant 0 : index
    %10 = vector.load %arg7[%c0_9, %c0_10] : memref<1x128xf32, #tpu.memory_space<vmem>>, vector<1x128xf32>
    %11 = vector.broadcast %10 : vector<1x128xf32> to vector<16x128xf32>
    %12 = arith.addf %9, %11 : vector<16x128xf32>
    %cst_11 = arith.constant 0.000000e+00 : f32
    %13 = vector.broadcast %cst_11 : f32 to vector<16x128xf32>
    %14 = arith.maximumf %12, %13 : vector<16x128xf32>
    %c0_12 = arith.constant 0 : index
    %c0_13 = arith.constant 0 : index
    %15 = vector.load %arg8[%c0_12, %c0_13] : memref<128x128xf32, #tpu.memory_space<vmem>>, vector<128x128xf32>
    %cst_14 = arith.constant dense<0.000000e+00> : vector<16x128xf32>
    %16 = tpu.matmul %14, %15, %cst_14 {dimension_numbers = #tpu.dot_dimension_numbers<[1], [0], [0], [1], [0, 0, 1, 1], [], []>} : vector<16x128xf32>, vector<128x128xf32>, vector<16x128xf32> -> vector<16x128xf32>
    %c0_15 = arith.constant 0 : index
    %c0_16 = arith.constant 0 : index
    %17 = vector.load %arg9[%c0_15, %c0_16] : memref<1x128xf32, #tpu.memory_space<vmem>>, vector<1x128xf32>
    %18 = vector.broadcast %17 : vector<1x128xf32> to vector<16x128xf32>
    %19 = arith.addf %16, %18 : vector<16x128xf32>
    %c0_17 = arith.constant 0 : index
    %c0_18 = arith.constant 0 : index
    %20 = vector.load %arg2[%c0_17, %c0_18] : memref<16x128xf32, #tpu.memory_space<vmem>>, vector<16x128xf32>
    %c0_19 = arith.constant 0 : index
    %c0_20 = arith.constant 0 : index
    %21 = vector.load %arg10[%c0_19, %c0_20] : memref<128x128xf32, #tpu.memory_space<vmem>>, vector<128x128xf32>
    %cst_21 = arith.constant dense<0.000000e+00> : vector<16x128xf32>
    %22 = tpu.matmul %19, %21, %cst_21 {dimension_numbers = #tpu.dot_dimension_numbers<[1], [0], [0], [1], [0, 0, 1, 1], [], []>} : vector<16x128xf32>, vector<128x128xf32>, vector<16x128xf32> -> vector<16x128xf32>
    %c0_22 = arith.constant 0 : index
    %c0_23 = arith.constant 0 : index
    %23 = vector.load %arg11[%c0_22, %c0_23] : memref<128x128xf32, #tpu.memory_space<vmem>>, vector<128x128xf32>
    %cst_24 = arith.constant dense<0.000000e+00> : vector<16x128xf32>
    %24 = tpu.matmul %20, %23, %cst_24 {dimension_numbers = #tpu.dot_dimension_numbers<[1], [0], [0], [1], [0, 0, 1, 1], [], []>} : vector<16x128xf32>, vector<128x128xf32>, vector<16x128xf32> -> vector<16x128xf32>
    %25 = arith.addf %22, %24 : vector<16x128xf32>
    %c0_25 = arith.constant 0 : index
    %c0_26 = arith.constant 0 : index
    %26 = vector.load %arg12[%c0_25, %c0_26] : memref<1x128xf32, #tpu.memory_space<vmem>>, vector<1x128xf32>
    %27 = vector.broadcast %26 : vector<1x128xf32> to vector<16x128xf32>
    %28 = arith.addf %25, %27 : vector<16x128xf32>
    %cst_27 = arith.constant 0.000000e+00 : f32
    %29 = vector.broadcast %cst_27 : f32 to vector<16x128xf32>
    %30 = arith.maximumf %28, %29 : vector<16x128xf32>
    %c0_28 = arith.constant 0 : index
    %c0_29 = arith.constant 0 : index
    %31 = vector.load %arg13[%c0_28, %c0_29] : memref<128x128xf32, #tpu.memory_space<vmem>>, vector<128x128xf32>
    %cst_30 = arith.constant dense<0.000000e+00> : vector<16x128xf32>
    %32 = tpu.matmul %30, %31, %cst_30 {dimension_numbers = #tpu.dot_dimension_numbers<[1], [0], [0], [1], [0, 0, 1, 1], [], []>} : vector<16x128xf32>, vector<128x128xf32>, vector<16x128xf32> -> vector<16x128xf32>
    %c0_31 = arith.constant 0 : index
    %c0_32 = arith.constant 0 : index
    %33 = vector.load %arg14[%c0_31, %c0_32] : memref<1x128xf32, #tpu.memory_space<vmem>>, vector<1x128xf32>
    %34 = vector.broadcast %33 : vector<1x128xf32> to vector<16x128xf32>
    %35 = arith.addf %32, %34 : vector<16x128xf32>
    %cst_33 = arith.constant 0.000000e+00 : f32
    %36 = vector.broadcast %cst_33 : f32 to vector<16x128xf32>
    %37 = arith.maximumf %35, %36 : vector<16x128xf32>
    %c0_34 = arith.constant 0 : index
    %c0_35 = arith.constant 0 : index
    %38 = vector.load %arg15[%c0_34, %c0_35] : memref<128x128xf32, #tpu.memory_space<vmem>>, vector<128x128xf32>
    %cst_36 = arith.constant dense<0.000000e+00> : vector<16x128xf32>
    %39 = tpu.matmul %37, %38, %cst_36 {dimension_numbers = #tpu.dot_dimension_numbers<[1], [0], [0], [1], [0, 0, 1, 1], [], []>} : vector<16x128xf32>, vector<128x128xf32>, vector<16x128xf32> -> vector<16x128xf32>
    %c0_37 = arith.constant 0 : index
    %c0_38 = arith.constant 0 : index
    %40 = vector.load %arg16[%c0_37, %c0_38] : memref<1x128xf32, #tpu.memory_space<vmem>>, vector<1x128xf32>
    %41 = vector.broadcast %40 : vector<1x128xf32> to vector<16x128xf32>
    %42 = arith.addf %39, %41 : vector<16x128xf32>
    %43 = math.absf %42 : vector<16x128xf32>
    %c0_39 = arith.constant 0 : index
    %c0_40 = arith.constant 0 : index
    %44 = memref.load %arg3[%c0_39, %c0_40] : memref<1x1xf32, #tpu.memory_space<smem>>
    %45 = vector.broadcast %44 : f32 to vector<16x128xf32>
    %46 = arith.mulf %43, %45 : vector<16x128xf32>
    %c0_41 = arith.constant 0 : index
    %c0_42 = arith.constant 0 : index
    %47 = vector.load %arg26[%c0_41, %c0_42] : memref<16x128xf32, #tpu.memory_space<vmem>>, vector<16x128xf32>
    tpu.vector_store %arg26[%c0_41, %c0_42], %46 {strides = array<i32>} : memref<16x128xf32, #tpu.memory_space<vmem>>, vector<16x128xf32>,
    %c0_43 = arith.constant 0 : index
    %c0_44 = arith.constant 0 : index
    %48 = vector.load %arg17[%c0_43, %c0_44] : memref<128x128xf32, #tpu.memory_space<vmem>>, vector<128x128xf32>
    %cst_45 = arith.constant dense<0.000000e+00> : vector<16x128xf32>
    %49 = tpu.matmul %19, %48, %cst_45 {dimension_numbers = #tpu.dot_dimension_numbers<[1], [0], [0], [1], [0, 0, 1, 1], [], []>} : vector<16x128xf32>, vector<128x128xf32>, vector<16x128xf32> -> vector<16x128xf32>
    %c0_46 = arith.constant 0 : index
    %c0_47 = arith.constant 0 : index
    %50 = vector.load %arg18[%c0_46, %c0_47] : memref<128x128xf32, #tpu.memory_space<vmem>>, vector<128x128xf32>
    %cst_48 = arith.constant dense<0.000000e+00> : vector<16x128xf32>
    %51 = tpu.matmul %20, %50, %cst_48 {dimension_numbers = #tpu.dot_dimension_numbers<[1], [0], [0], [1], [0, 0, 1, 1], [], []>} : vector<16x128xf32>, vector<128x128xf32>, vector<16x128xf32> -> vector<16x128xf32>
    %52 = arith.addf %49, %51 : vector<16x128xf32>
    %c0_49 = arith.constant 0 : index
    %c0_50 = arith.constant 0 : index
    %53 = vector.load %arg19[%c0_49, %c0_50] : memref<1x128xf32, #tpu.memory_space<vmem>>, vector<1x128xf32>
    %54 = vector.broadcast %53 : vector<1x128xf32> to vector<16x128xf32>
    %55 = arith.addf %52, %54 : vector<16x128xf32>
    %cst_51 = arith.constant 0.000000e+00 : f32
    %56 = vector.broadcast %cst_51 : f32 to vector<16x128xf32>
    %57 = arith.maximumf %55, %56 : vector<16x128xf32>
    %c0_52 = arith.constant 0 : index
    %c0_53 = arith.constant 0 : index
    %58 = vector.load %arg20[%c0_52, %c0_53] : memref<128x128xf32, #tpu.memory_space<vmem>>, vector<128x128xf32>
    %cst_54 = arith.constant dense<0.000000e+00> : vector<16x128xf32>
    %59 = tpu.matmul %57, %58, %cst_54 {dimension_numbers = #tpu.dot_dimension_numbers<[1], [0], [0], [1], [0, 0, 1, 1], [], []>} : vector<16x128xf32>, vector<128x128xf32>, vector<16x128xf32> -> vector<16x128xf32>
    %c0_55 = arith.constant 0 : index
    %c0_56 = arith.constant 0 : index
    %60 = vector.load %arg21[%c0_55, %c0_56] : memref<1x128xf32, #tpu.memory_space<vmem>>, vector<1x128xf32>
    %61 = vector.broadcast %60 : vector<1x128xf32> to vector<16x128xf32>
    %62 = arith.addf %59, %61 : vector<16x128xf32>
    %63 = math.absf %62 : vector<16x128xf32>
    %c0_57 = arith.constant 0 : index
    %c0_58 = arith.constant 0 : index
    %64 = vector.load %arg27[%c0_57, %c0_58] : memref<16x128xf32, #tpu.memory_space<vmem>>, vector<16x128xf32>
    tpu.vector_store %arg27[%c0_57, %c0_58], %63 {strides = array<i32>} : memref<16x128xf32, #tpu.memory_space<vmem>>, vector<16x128xf32>,
    %c0_59 = arith.constant 0 : index
    %c0_60 = arith.constant 0 : index
    %65 = vector.load %arg22[%c0_59, %c0_60] : memref<128x128xf32, #tpu.memory_space<vmem>>, vector<128x128xf32>
    %cst_61 = arith.constant dense<0.000000e+00> : vector<16x128xf32>
    %66 = tpu.matmul %19, %65, %cst_61 {dimension_numbers = #tpu.dot_dimension_numbers<[1], [0], [0], [1], [0, 0, 1, 1], [], []>} : vector<16x128xf32>, vector<128x128xf32>, vector<16x128xf32> -> vector<16x128xf32>
    %c0_62 = arith.constant 0 : index
    %c0_63 = arith.constant 0 : index
    %67 = vector.load %arg23[%c0_62, %c0_63] : memref<1x128xf32, #tpu.memory_space<vmem>>, vector<1x128xf32>
    %68 = vector.broadcast %67 : vector<1x128xf32> to vector<16x128xf32>
    %69 = arith.addf %66, %68 : vector<16x128xf32>
    %cst_64 = arith.constant 0.000000e+00 : f32
    %70 = vector.broadcast %cst_64 : f32 to vector<16x128xf32>
    %71 = arith.maximumf %69, %70 : vector<16x128xf32>
    %c0_65 = arith.constant 0 : index
    %c0_66 = arith.constant 0 : index
    %72 = vector.load %arg24[%c0_65, %c0_66] : memref<128x128xf32, #tpu.memory_space<vmem>>, vector<128x128xf32>
    %cst_67 = arith.constant dense<0.000000e+00> : vector<16x128xf32>
    %73 = tpu.matmul %71, %72, %cst_67 {dimension_numbers = #tpu.dot_dimension_numbers<[1], [0], [0], [1], [0, 0, 1, 1], [], []>} : vector<16x128xf32>, vector<128x128xf32>, vector<16x128xf32> -> vector<16x128xf32>
    %c0_68 = arith.constant 0 : index
    %c0_69 = arith.constant 0 : index
    %74 = vector.load %arg25[%c0_68, %c0_69] : memref<1x128xf32, #tpu.memory_space<vmem>>, vector<1x128xf32>
    %75 = vector.broadcast %74 : vector<1x128xf32> to vector<16x128xf32>
    %76 = arith.addf %73, %75 : vector<16x128xf32>
    %77 = math.absf %76 : vector<16x128xf32>
    %c0_70 = arith.constant 0 : index
    %c0_71 = arith.constant 0 : index
    %78 = vector.load %arg28[%c0_70, %c0_71] : memref<16x128xf32, #tpu.memory_space<vmem>>, vector<16x128xf32>
    tpu.vector_store %arg28[%c0_70, %c0_71], %77 {strides = array<i32>} : memref<16x128xf32, #tpu.memory_space<vmem>>, vector<16x128xf32>,
    return
  }
  func.func @transform_0(%arg0: i32) -> (i32, i32) {
    %c0_i32 = arith.constant 0 : i32
    %c0_i32_0 = arith.constant 0 : i32
    return %arg0, %c0_i32 : i32, i32
  }
  func.func @transform_1(%arg0: i32) -> (i32, i32) {
    %c0_i32 = arith.constant 0 : i32
    %c0_i32_0 = arith.constant 0 : i32
    return %arg0, %c0_i32 : i32, i32
  }
  func.func @transform_2(%arg0: i32) -> (i32, i32) {
    %c0_i32 = arith.constant 0 : i32
    %c0_i32_0 = arith.constant 0 : i32
    %c0_i32_1 = arith.constant 0 : i32
    return %c0_i32, %c0_i32_0 : i32, i32
  }
  func.func @transform_3(%arg0: i32) -> (i32, i32) {
    %c0_i32 = arith.constant 0 : i32
    %c0_i32_0 = arith.constant 0 : i32
    %c0_i32_1 = arith.constant 0 : i32
    return %c0_i32, %c0_i32_0 : i32, i32
  }
  func.func @transform_4(%arg0: i32) -> (i32, i32) {
    %c0_i32 = arith.constant 0 : i32
    %c0_i32_0 = arith.constant 0 : i32
    %c0_i32_1 = arith.constant 0 : i32
    return %c0_i32, %c0_i32_0 : i32, i32
  }
  func.func @transform_5(%arg0: i32) -> (i32, i32) {
    %c0_i32 = arith.constant 0 : i32
    %c0_i32_0 = arith.constant 0 : i32
    %c0_i32_1 = arith.constant 0 : i32
    return %c0_i32, %c0_i32_0 : i32, i32
  }
  func.func @transform_6(%arg0: i32) -> (i32, i32) {
    %c0_i32 = arith.constant 0 : i32
    %c0_i32_0 = arith.constant 0 : i32
    %c0_i32_1 = arith.constant 0 : i32
    return %c0_i32, %c0_i32_0 : i32, i32
  }
  func.func @transform_7(%arg0: i32) -> (i32, i32) {
    %c0_i32 = arith.constant 0 : i32
    %c0_i32_0 = arith.constant 0 : i32
    %c0_i32_1 = arith.constant 0 : i32
    return %c0_i32, %c0_i32_0 : i32, i32
  }
  func.func @transform_8(%arg0: i32) -> (i32, i32) {
    %c0_i32 = arith.constant 0 : i32
    %c0_i32_0 = arith.constant 0 : i32
    %c0_i32_1 = arith.constant 0 : i32
    return %c0_i32, %c0_i32_0 : i32, i32
  }
  func.func @transform_9(%arg0: i32) -> (i32, i32) {
    %c0_i32 = arith.constant 0 : i32
    %c0_i32_0 = arith.constant 0 : i32
    %c0_i32_1 = arith.constant 0 : i32
    return %c0_i32, %c0_i32_0 : i32, i32
  }
  func.func @transform_10(%arg0: i32) -> (i32, i32) {
    %c0_i32 = arith.constant 0 : i32
    %c0_i32_0 = arith.constant 0 : i32
    %c0_i32_1 = arith.constant 0 : i32
    return %c0_i32, %c0_i32_0 : i32, i32
  }
  func.func @transform_11(%arg0: i32) -> (i32, i32) {
    %c0_i32 = arith.constant 0 : i32
    %c0_i32_0 = arith.constant 0 : i32
    %c0_i32_1 = arith.constant 0 : i32
    return %c0_i32, %c0_i32_0 : i32, i32
  }
  func.func @transform_12(%arg0: i32) -> (i32, i32) {
    %c0_i32 = arith.constant 0 : i32
    %c0_i32_0 = arith.constant 0 : i32
    %c0_i32_1 = arith.constant 0 : i32
    return %c0_i32, %c0_i32_0 : i32, i32
  }
  func.func @transform_13(%arg0: i32) -> (i32, i32) {
    %c0_i32 = arith.constant 0 : i32
    %c0_i32_0 = arith.constant 0 : i32
    %c0_i32_1 = arith.constant 0 : i32
    return %c0_i32, %c0_i32_0 : i32, i32
  }
  func.func @transform_14(%arg0: i32) -> (i32, i32) {
    %c0_i32 = arith.constant 0 : i32
    %c0_i32_0 = arith.constant 0 : i32
    %c0_i32_1 = arith.constant 0 : i32
    return %c0_i32, %c0_i32_0 : i32, i32
  }
  func.func @transform_15(%arg0: i32) -> (i32, i32) {
    %c0_i32 = arith.constant 0 : i32
    %c0_i32_0 = arith.constant 0 : i32
    %c0_i32_1 = arith.constant 0 : i32
    return %c0_i32, %c0_i32_0 : i32, i32
  }
  func.func @transform_16(%arg0: i32) -> (i32, i32) {
    %c0_i32 = arith.constant 0 : i32
    %c0_i32_0 = arith.constant 0 : i32
    %c0_i32_1 = arith.constant 0 : i32
    return %c0_i32, %c0_i32_0 : i32, i32
  }
  func.func @transform_17(%arg0: i32) -> (i32, i32) {
    %c0_i32 = arith.constant 0 : i32
    %c0_i32_0 = arith.constant 0 : i32
    %c0_i32_1 = arith.constant 0 : i32
    return %c0_i32, %c0_i32_0 : i32, i32
  }
  func.func @transform_18(%arg0: i32) -> (i32, i32) {
    %c0_i32 = arith.constant 0 : i32
    %c0_i32_0 = arith.constant 0 : i32
    %c0_i32_1 = arith.constant 0 : i32
    return %c0_i32, %c0_i32_0 : i32, i32
  }
  func.func @transform_19(%arg0: i32) -> (i32, i32) {
    %c0_i32 = arith.constant 0 : i32
    %c0_i32_0 = arith.constant 0 : i32
    %c0_i32_1 = arith.constant 0 : i32
    return %c0_i32, %c0_i32_0 : i32, i32
  }
  func.func @transform_20(%arg0: i32) -> (i32, i32) {
    %c0_i32 = arith.constant 0 : i32
    %c0_i32_0 = arith.constant 0 : i32
    %c0_i32_1 = arith.constant 0 : i32
    return %c0_i32, %c0_i32_0 : i32, i32
  }
  func.func @transform_21(%arg0: i32) -> (i32, i32) {
    %c0_i32 = arith.constant 0 : i32
    %c0_i32_0 = arith.constant 0 : i32
    %c0_i32_1 = arith.constant 0 : i32
    return %c0_i32, %c0_i32_0 : i32, i32
  }
  func.func @transform_22(%arg0: i32) -> (i32, i32) {
    %c0_i32 = arith.constant 0 : i32
    %c0_i32_0 = arith.constant 0 : i32
    %c0_i32_1 = arith.constant 0 : i32
    return %c0_i32, %c0_i32_0 : i32, i32
  }
  func.func @transform_23(%arg0: i32) -> (i32, i32) {
    %c0_i32 = arith.constant 0 : i32
    %c0_i32_0 = arith.constant 0 : i32
    %c0_i32_1 = arith.constant 0 : i32
    return %c0_i32, %c0_i32_0 : i32, i32
  }
  func.func @transform_24(%arg0: i32) -> (i32, i32) {
    %c0_i32 = arith.constant 0 : i32
    %c0_i32_0 = arith.constant 0 : i32
    %c0_i32_1 = arith.constant 0 : i32
    return %c0_i32, %c0_i32_0 : i32, i32
  }
  func.func @transform_25(%arg0: i32) -> (i32, i32) {
    %c0_i32 = arith.constant 0 : i32
    %c0_i32_0 = arith.constant 0 : i32
    return %arg0, %c0_i32 : i32, i32
  }
  func.func @transform_26(%arg0: i32) -> (i32, i32) {
    %c0_i32 = arith.constant 0 : i32
    %c0_i32_0 = arith.constant 0 : i32
    return %arg0, %c0_i32 : i32, i32
  }
  func.func @transform_27(%arg0: i32) -> (i32, i32) {
    %c0_i32 = arith.constant 0 : i32
    %c0_i32_0 = arith.constant 0 : i32
    return %arg0, %c0_i32 : i32, i32
  }
}

</mosaic_0001>

<llo_original>
// kernel: _lambda_.1
$region0: #{_lambda_.1}
  #allocation0 [shape = 'u32[]', space=smem, size = 0x4, offset = 0x4, fixed_abs, tag = 'smem constant byte address 0x4 - core index']
  #allocation1 [shape = 'u32[144,128]{1,0:T(1,128)}', space=vmem, size = 0x12000, scoped, tag = 'internal scratch']
  #allocation2 [shape = 'f32[1,1]{1,0:T(1,128)S(6)}', space=smem, size = 0x200, scoped, tag = 'scoped memory for _lambda_.1']
  %s0 = inlined_call_operand.vmem [shape: f32[16,128], index: 0, kind: input, shape index: {}]
  %s1 = inlined_call_operand.vmem [shape: f32[16,128], index: 1, kind: input, shape index: {}]
  %s2 = inlined_call_operand.<no memory space> [shape: f32[1,1], index: 2, kind: input, shape index: {}]
  %s3 = inlined_call_operand.hbm [shape: f32[128,128], index: 3, kind: input, shape index: {}]
  %s4 = inlined_call_operand.vmem [shape: f32[1,128], index: 4, kind: input, shape index: {}]
  %s5 = inlined_call_operand.hbm [shape: f32[128,128], index: 5, kind: input, shape index: {}]
  %s6 = inlined_call_operand.vmem [shape: f32[1,128], index: 6, kind: input, shape index: {}]
  %s7 = inlined_call_operand.hbm [shape: f32[128,128], index: 7, kind: input, shape index: {}]
  %s8 = inlined_call_operand.vmem [shape: f32[1,128], index: 8, kind: input, shape index: {}]
  %s9 = inlined_call_operand.hbm [shape: f32[128,128], index: 9, kind: input, shape index: {}]
  %s10 = inlined_call_operand.hbm [shape: f32[128,128], index: 10, kind: input, shape index: {}]
  %s11 = inlined_call_operand.vmem [shape: f32[1,128], index: 11, kind: input, shape index: {}]
  %s12 = inlined_call_operand.hbm [shape: f32[128,128], index: 12, kind: input, shape index: {}]
  %s13 = inlined_call_operand.vmem [shape: f32[1,128], index: 13, kind: input, shape index: {}]
  %s14 = inlined_call_operand.hbm [shape: f32[128,128], index: 14, kind: input, shape index: {}]
  %s15 = inlined_call_operand.vmem [shape: f32[1,128], index: 15, kind: input, shape index: {}]
  %s16 = inlined_call_operand.hbm [shape: f32[128,128], index: 16, kind: input, shape index: {}]
  %s17 = inlined_call_operand.hbm [shape: f32[128,128], index: 17, kind: input, shape index: {}]
  %s18 = inlined_call_operand.vmem [shape: f32[1,128], index: 18, kind: input, shape index: {}]
  %s19 = inlined_call_operand.hbm [shape: f32[128,128], index: 19, kind: input, shape index: {}]
  %s20 = inlined_call_operand.vmem [shape: f32[1,128], index: 20, kind: input, shape index: {}]
  %s21 = inlined_call_operand.hbm [shape: f32[128,128], index: 21, kind: input, shape index: {}]
  %s22 = inlined_call_operand.vmem [shape: f32[1,128], index: 22, kind: input, shape index: {}]
  %s23 = inlined_call_operand.vmem [shape: f32[128,128], index: 23, kind: input, shape index: {}]
  %s24 = inlined_call_operand.vmem [shape: f32[1,128], index: 24, kind: input, shape index: {}]
  %s25 = inlined_call_operand.vmem [shape: f32[16,128], index: 25, kind: output, shape index: {0}]
  %s26 = inlined_call_operand.vmem [shape: f32[16,128], index: 26, kind: output, shape index: {1}]
  %s27 = inlined_call_operand.vmem [shape: f32[16,128], index: 27, kind: output, shape index: {2}]
  %28 = xla_tuple %s25, %s26, %s27
  %s29 = sld [smem:[#allocation0]]
  $region170: #{_lambda_.1} parent=0
    _
  %s31 = ssub.s32 1, %s29
  %s32 = scalar_select 0, %s31, %s29
  %33 = sst [smem:[#allocation2]] %s2
  $region1: #{_lambda_.1} parent=0
    #allocation3 [shape = 'u8[65536]{0}', space=vmem, size = 0x10000, scoped, tag = 'input window, operand 3, single buffered']
    #allocation4 [shape = 's32[1]{0}', space=sflag, size = 0x4, scoped, tag = 'scoped memory for _lambda_.1']
    #allocation5 [shape = 'u8[65536]{0}', space=vmem, size = 0x10000, scoped, tag = 'input window, operand 5, single buffered']
    #allocation6 [shape = 's32[1]{0}', space=sflag, size = 0x4, scoped, tag = 'scoped memory for _lambda_.1']
    #allocation7 [shape = 'u8[65536]{0}', space=vmem, size = 0x10000, scoped, tag = 'input window, operand 7, single buffered']
    #allocation8 [shape = 'u8[65536]{0}', space=vmem, size = 0x10000, scoped, tag = 'input window, operand 9, single buffered']
    #allocation9 [shape = 's32[1]{0}', space=sflag, size = 0x4, scoped, tag = 'scoped memory for _lambda_.1']
    #allocation10 [shape = 'u8[65536]{0}', space=vmem, size = 0x10000, scoped, tag = 'input window, operand 10, single buffered']
    #allocation11 [shape = 'u8[65536]{0}', space=vmem, size = 0x10000, scoped, tag = 'input window, operand 12, single buffered']
    #allocation12 [shape = 's32[1]{0}', space=sflag, size = 0x4, scoped, tag = 'scoped memory for _lambda_.1']
    #allocation13 [shape = 'u8[65536]{0}', space=vmem, size = 0x10000, scoped, tag = 'input window, operand 14, single buffered']
    #allocation14 [shape = 'u8[65536]{0}', space=vmem, size = 0x10000, scoped, tag = 'input window, operand 16, single buffered']
    #allocation15 [shape = 's32[1]{0}', space=sflag, size = 0x4, scoped, tag = 'scoped memory for _lambda_.1']
    #allocation16 [shape = 'u8[65536]{0}', space=vmem, size = 0x10000, scoped, tag = 'input window, operand 17, single buffered']
    #allocation17 [shape = 'u8[65536]{0}', space=vmem, size = 0x10000, scoped, tag = 'input window, operand 19, single buffered']
    #allocation18 [shape = 's32[1]{0}', space=sflag, size = 0x4, scoped, tag = 'scoped memory for _lambda_.1']
    #allocation19 [shape = 'u8[65536]{0}', space=vmem, size = 0x10000, scoped, tag = 'input window, operand 21, single buffered']
    %34 = vsyncpa [#allocation4], 0
    %35 = vsyncpa [#allocation6], 0
    %36 = vsyncpa [#allocation9], 0
    %37 = vsyncpa [#allocation12], 0
    %38 = vsyncpa [#allocation15], 0
    %39 = vsyncpa [#allocation18], 0
    // Predicated region
    $region2: #{_lambda_.1} parent=1 // pred_check
      _
    $region3: #{_lambda_.1} parent=1 // pred_check_branch
      %41 = sbr.rel (0) target = $region5
    $region4: #{_lambda_.1} parent=1 // pred_region
      _
    $region5: #{_lambda_.1} parent=1 // pred_fallthru
      _
    // Predicated region
    $region6: #{_lambda_.1} parent=1 // pred_check
      _
    $region7: #{_lambda_.1} parent=1 // pred_check_branch
      %43 = sbr.rel (0) target = $region9
    $region8: #{_lambda_.1} parent=1 // pred_region
      _
    $region9: #{_lambda_.1} parent=1 // pred_fallthru
      _
    // Predicated region
    $region10: #{_lambda_.1} parent=1 // pred_check
      _
    $region11: #{_lambda_.1} parent=1 // pred_check_branch
      %45 = sbr.rel (0) target = $region13
    $region12: #{_lambda_.1} parent=1 // pred_region
      _
    $region13: #{_lambda_.1} parent=1 // pred_fallthru
      _
    // Predicated region
    $region14: #{_lambda_.1} parent=1 // pred_check
      _
    $region15: #{_lambda_.1} parent=1 // pred_check_branch
      %47 = sbr.rel (0) target = $region17
    $region16: #{_lambda_.1} parent=1 // pred_region
      %s49 = ssub.s32 2048, 2048
      %50 = vsyncadd [#allocation4], %s49
      %s51 = sshll.u32 [#allocation3], 4
      %s52 = int_to_ptr.vmem [resolvable:$true] %s51
      %57 = dma.hbm_to_vmem [thread:$0]  %s3, 2048, %s52, [#allocation4], 128, 128, 8
    $region17: #{_lambda_.1} parent=1 // pred_fallthru
      _
    // Predicated region
    $region18: #{_lambda_.1} parent=1 // pred_check
      _
    $region19: #{_lambda_.1} parent=1 // pred_check_branch
      %59 = sbr.rel (0) target = $region21
    $region20: #{_lambda_.1} parent=1 // pred_region
      _
    $region21: #{_lambda_.1} parent=1 // pred_fallthru
      _
    // Predicated region
    $region22: #{_lambda_.1} parent=1 // pred_check
      _
    $region23: #{_lambda_.1} parent=1 // pred_check_branch
      %61 = sbr.rel (0) target = $region25
    $region24: #{_lambda_.1} parent=1 // pred_region
      %s63 = ssub.s32 2048, 2048
      %64 = vsyncadd [#allocation6], %s63
      %s65 = sshll.u32 [#allocation5], 4
      %s66 = int_to_ptr.vmem [resolvable:$true] %s65
      %71 = dma.hbm_to_vmem [thread:$0]  %s5, 2048, %s66, [#allocation6], 128, 128, 8
    $region25: #{_lambda_.1} parent=1 // pred_fallthru
      _
    // Predicated region
    $region26: #{_lambda_.1} parent=1 // pred_check
      _
    $region27: #{_lambda_.1} parent=1 // pred_check_branch
      %73 = sbr.rel (0) target = $region29
    $region28: #{_lambda_.1} parent=1 // pred_region
      _
    $region29: #{_lambda_.1} parent=1 // pred_fallthru
      _
    // Predicated region
    $region30: #{_lambda_.1} parent=1 // pred_check
      _
    $region31: #{_lambda_.1} parent=1 // pred_check_branch
      %75 = sbr.rel (0) target = $region33
    $region32: #{_lambda_.1} parent=1 // pred_region
      %s77 = ssub.s32 2048, 2048
      %78 = vsyncadd [#allocation6], %s77
      %s79 = sshll.u32 [#allocation7], 4
      %s80 = int_to_ptr.vmem [resolvable:$true] %s79
      %85 = dma.hbm_to_vmem [thread:$0]  %s7, 2048, %s80, [#allocation6], 128, 128, 8
    $region33: #{_lambda_.1} parent=1 // pred_fallthru
      _
    // Predicated region
    $region34: #{_lambda_.1} parent=1 // pred_check
      _
    $region35: #{_lambda_.1} parent=1 // pred_check_branch
      %87 = sbr.rel (0) target = $region37
    $region36: #{_lambda_.1} parent=1 // pred_region
      _
    $region37: #{_lambda_.1} parent=1 // pred_fallthru
      _
    // Predicated region
    $region38: #{_lambda_.1} parent=1 // pred_check
      _
    $region39: #{_lambda_.1} parent=1 // pred_check_branch
      %89 = sbr.rel (0) target = $region41
    $region40: #{_lambda_.1} parent=1 // pred_region
      %s91 = ssub.s32 2048, 2048
      %92 = vsyncadd [#allocation9], %s91
      %s93 = sshll.u32 [#allocation8], 4
      %s94 = int_to_ptr.vmem [resolvable:$true] %s93
      %99 = dma.hbm_to_vmem [thread:$0]  %s9, 2048, %s94, [#allocation9], 128, 128, 8
    $region41: #{_lambda_.1} parent=1 // pred_fallthru
      _
    // Predicated region
    $region42: #{_lambda_.1} parent=1 // pred_check
      _
    $region43: #{_lambda_.1} parent=1 // pred_check_branch
      %101 = sbr.rel (0) target = $region45
    $region44: #{_lambda_.1} parent=1 // pred_region
      %s103 = ssub.s32 2048, 2048
      %104 = vsyncadd [#allocation9], %s103
      %s105 = sshll.u32 [#allocation10], 4
      %s106 = int_to_ptr.vmem [resolvable:$true] %s105
      %111 = dma.hbm_to_vmem [thread:$0]  %s10, 2048, %s106, [#allocation9], 128, 128, 8
    $region45: #{_lambda_.1} parent=1 // pred_fallthru
      _
    // Predicated region
    $region46: #{_lambda_.1} parent=1 // pred_check
      _
    $region47: #{_lambda_.1} parent=1 // pred_check_branch
      %113 = sbr.rel (0) target = $region49
    $region48: #{_lambda_.1} parent=1 // pred_region
      _
    $region49: #{_lambda_.1} parent=1 // pred_fallthru
      _
    // Predicated region
    $region50: #{_lambda_.1} parent=1 // pred_check
      _
    $region51: #{_lambda_.1} parent=1 // pred_check_branch
      %115 = sbr.rel (0) target = $region53
    $region52: #{_lambda_.1} parent=1 // pred_region
      %s117 = ssub.s32 2048, 2048
      %118 = vsyncadd [#allocation12], %s117
      %s119 = sshll.u32 [#allocation11], 4
      %s120 = int_to_ptr.vmem [resolvable:$true] %s119
      %125 = dma.hbm_to_vmem [thread:$0]  %s12, 2048, %s120, [#allocation12], 128, 128, 8
    $region53: #{_lambda_.1} parent=1 // pred_fallthru
      _
    // Predicated region
    $region54: #{_lambda_.1} parent=1 // pred_check
      _
    $region55: #{_lambda_.1} parent=1 // pred_check_branch
      %127 = sbr.rel (0) target = $region57
    $region56: #{_lambda_.1} parent=1 // pred_region
      _
    $region57: #{_lambda_.1} parent=1 // pred_fallthru
      _
    // Predicated region
    $region58: #{_lambda_.1} parent=1 // pred_check
      _
    $region59: #{_lambda_.1} parent=1 // pred_check_branch
      %129 = sbr.rel (0) target = $region61
    $region60: #{_lambda_.1} parent=1 // pred_region
      %s131 = ssub.s32 2048, 2048
      %132 = vsyncadd [#allocation12], %s131
      %s133 = sshll.u32 [#allocation13], 4
      %s134 = int_to_ptr.vmem [resolvable:$true] %s133
      %139 = dma.hbm_to_vmem [thread:$0]  %s14, 2048, %s134, [#allocation12], 128, 128, 8
    $region61: #{_lambda_.1} parent=1 // pred_fallthru
      _
    // Predicated region
    $region62: #{_lambda_.1} parent=1 // pred_check
      _
    $region63: #{_lambda_.1} parent=1 // pred_check_branch
      %141 = sbr.rel (0) target = $region65
    $region64: #{_lambda_.1} parent=1 // pred_region
      _
    $region65: #{_lambda_.1} parent=1 // pred_fallthru
      _
    // Predicated region
    $region66: #{_lambda_.1} parent=1 // pred_check
      _
    $region67: #{_lambda_.1} parent=1 // pred_check_branch
      %143 = sbr.rel (0) target = $region69
    $region68: #{_lambda_.1} parent=1 // pred_region
      %s145 = ssub.s32 2048, 2048
      %146 = vsyncadd [#allocation15], %s145
      %s147 = sshll.u32 [#allocation14], 4
      %s148 = int_to_ptr.vmem [resolvable:$true] %s147
      %153 = dma.hbm_to_vmem [thread:$0]  %s16, 2048, %s148, [#allocation15], 128, 128, 8
    $region69: #{_lambda_.1} parent=1 // pred_fallthru
      _
    // Predicated region
    $region70: #{_lambda_.1} parent=1 // pred_check
      _
    $region71: #{_lambda_.1} parent=1 // pred_check_branch
      %155 = sbr.rel (0) target = $region73
    $region72: #{_lambda_.1} parent=1 // pred_region
      %s157 = ssub.s32 2048, 2048
      %158 = vsyncadd [#allocation15], %s157
      %s159 = sshll.u32 [#allocation16], 4
      %s160 = int_to_ptr.vmem [resolvable:$true] %s159
      %165 = dma.hbm_to_vmem [thread:$0]  %s17, 2048, %s160, [#allocation15], 128, 128, 8
    $region73: #{_lambda_.1} parent=1 // pred_fallthru
      _
    // Predicated region
    $region74: #{_lambda_.1} parent=1 // pred_check
      _
    $region75: #{_lambda_.1} parent=1 // pred_check_branch
      %167 = sbr.rel (0) target = $region77
    $region76: #{_lambda_.1} parent=1 // pred_region
      _
    $region77: #{_lambda_.1} parent=1 // pred_fallthru
      _
    // Predicated region
    $region78: #{_lambda_.1} parent=1 // pred_check
      _
    $region79: #{_lambda_.1} parent=1 // pred_check_branch
      %169 = sbr.rel (0) target = $region81
    $region80: #{_lambda_.1} parent=1 // pred_region
      %s171 = ssub.s32 2048, 2048
      %172 = vsyncadd [#allocation18], %s171
      %s173 = sshll.u32 [#allocation17], 4
      %s174 = int_to_ptr.vmem [resolvable:$true] %s173
      %179 = dma.hbm_to_vmem [thread:$0]  %s19, 2048, %s174, [#allocation18], 128, 128, 8
    $region81: #{_lambda_.1} parent=1 // pred_fallthru
      _
    // Predicated region
    $region82: #{_lambda_.1} parent=1 // pred_check
      _
    $region83: #{_lambda_.1} parent=1 // pred_check_branch
      %181 = sbr.rel (0) target = $region85
    $region84: #{_lambda_.1} parent=1 // pred_region
      _
    $region85: #{_lambda_.1} parent=1 // pred_fallthru
      _
    // Predicated region
    $region86: #{_lambda_.1} parent=1 // pred_check
      _
    $region87: #{_lambda_.1} parent=1 // pred_check_branch
      %183 = sbr.rel (0) target = $region89
    $region88: #{_lambda_.1} parent=1 // pred_region
      %s185 = ssub.s32 2048, 2048
      %186 = vsyncadd [#allocation18], %s185
      %s187 = sshll.u32 [#allocation19], 4
      %s188 = int_to_ptr.vmem [resolvable:$true] %s187
      %193 = dma.hbm_to_vmem [thread:$0]  %s21, 2048, %s188, [#allocation18], 128, 128, 8
    $region89: #{_lambda_.1} parent=1 // pred_fallthru
      _
    // Predicated region
    $region90: #{_lambda_.1} parent=1 // pred_check
      _
    $region91: #{_lambda_.1} parent=1 // pred_check_branch
      %195 = sbr.rel (0) target = $region93
    $region92: #{_lambda_.1} parent=1 // pred_region
      _
    $region93: #{_lambda_.1} parent=1 // pred_fallthru
      _
    // Predicated region
    $region94: #{_lambda_.1} parent=1 // pred_check
      _
    $region95: #{_lambda_.1} parent=1 // pred_check_branch
      %197 = sbr.rel (0) target = $region97
    $region96: #{_lambda_.1} parent=1 // pred_region
      _
    $region97: #{_lambda_.1} parent=1 // pred_fallthru
      _
    // Predicated region
    $region98: #{_lambda_.1} parent=1 // pred_check
      _
    $region99: #{_lambda_.1} parent=1 // pred_check_branch
      %199 = sbr.rel (0) target = $region101
    $region100: #{_lambda_.1} parent=1 // pred_region
      _
    $region101: #{_lambda_.1} parent=1 // pred_fallthru
      _
    // Predicated region
    $region102: #{_lambda_.1} parent=1 // pred_check
      _
    $region103: #{_lambda_.1} parent=1 // pred_check_branch
      %201 = sbr.rel (0) target = $region105
    $region104: #{_lambda_.1} parent=1 // pred_region
      %202 = dma.done [#allocation4], 2048
    $region105: #{_lambda_.1} parent=1 // pred_fallthru
      _
    // Predicated region
    $region106: #{_lambda_.1} parent=1 // pred_check
      _
    $region107: #{_lambda_.1} parent=1 // pred_check_branch
      %204 = sbr.rel (0) target = $region109
    $region108: #{_lambda_.1} parent=1 // pred_region
      %205 = dma.done [#allocation6], 2048
    $region109: #{_lambda_.1} parent=1 // pred_fallthru
      _
    // Predicated region
    $region110: #{_lambda_.1} parent=1 // pred_check
      _
    $region111: #{_lambda_.1} parent=1 // pred_check_branch
      %207 = sbr.rel (0) target = $region113
    $region112: #{_lambda_.1} parent=1 // pred_region
      %208 = dma.done [#allocation6], 2048
    $region113: #{_lambda_.1} parent=1 // pred_fallthru
      _
    // Predicated region
    $region114: #{_lambda_.1} parent=1 // pred_check
      _
    $region115: #{_lambda_.1} parent=1 // pred_check_branch
      %210 = sbr.rel (0) target = $region117
    $region116: #{_lambda_.1} parent=1 // pred_region
      %211 = dma.done [#allocation9], 2048
    $region117: #{_lambda_.1} parent=1 // pred_fallthru
      _
    // Predicated region
    $region118: #{_lambda_.1} parent=1 // pred_check
      _
    $region119: #{_lambda_.1} parent=1 // pred_check_branch
      %213 = sbr.rel (0) target = $region121
    $region120: #{_lambda_.1} parent=1 // pred_region
      %214 = dma.done [#allocation9], 2048
    $region121: #{_lambda_.1} parent=1 // pred_fallthru
      _
    // Predicated region
    $region122: #{_lambda_.1} parent=1 // pred_check
      _
    $region123: #{_lambda_.1} parent=1 // pred_check_branch
      %216 = sbr.rel (0) target = $region125
    $region124: #{_lambda_.1} parent=1 // pred_region
      %217 = dma.done [#allocation12], 2048
    $region125: #{_lambda_.1} parent=1 // pred_fallthru
      _
    // Predicated region
    $region126: #{_lambda_.1} parent=1 // pred_check
      _
    $region127: #{_lambda_.1} parent=1 // pred_check_branch
      %219 = sbr.rel (0) target = $region129
    $region128: #{_lambda_.1} parent=1 // pred_region
      %220 = dma.done [#allocation12], 2048
    $region129: #{_lambda_.1} parent=1 // pred_fallthru
      _
    // Predicated region
    $region130: #{_lambda_.1} parent=1 // pred_check
      _
    $region131: #{_lambda_.1} parent=1 // pred_check_branch
      %222 = sbr.rel (0) target = $region133
    $region132: #{_lambda_.1} parent=1 // pred_region
      %223 = dma.done [#allocation15], 2048
    $region133: #{_lambda_.1} parent=1 // pred_fallthru
      _
    // Predicated region
    $region134: #{_lambda_.1} parent=1 // pred_check
      _
    $region135: #{_lambda_.1} parent=1 // pred_check_branch
      %225 = sbr.rel (0) target = $region137
    $region136: #{_lambda_.1} parent=1 // pred_region
      %226 = dma.done [#allocation15], 2048
    $region137: #{_lambda_.1} parent=1 // pred_fallthru
      _
    // Predicated region
    $region138: #{_lambda_.1} parent=1 // pred_check
      _
    $region139: #{_lambda_.1} parent=1 // pred_check_branch
      %228 = sbr.rel (0) target = $region141
    $region140: #{_lambda_.1} parent=1 // pred_region
      %229 = dma.done [#allocation18], 2048
    $region141: #{_lambda_.1} parent=1 // pred_fallthru
      _
    // Predicated region
    $region142: #{_lambda_.1} parent=1 // pred_check
      _
    $region143: #{_lambda_.1} parent=1 // pred_check_branch
      %231 = sbr.rel (0) target = $region145
    $region144: #{_lambda_.1} parent=1 // pred_region
      %232 = dma.done [#allocation18], 2048
    $region145: #{_lambda_.1} parent=1 // pred_fallthru
      _
    %v233 = vld [vmem:[%s0] sm:$0xff]
    %v234 = vld [vmem:[%s0 + $0x8] sm:$0xff]
    %v235 = vld [vmem:[#allocation3] sm:$0xff]
    %v236 = vld [vmem:[#allocation3 + $0x8] sm:$0xff]
    %v237 = vld [vmem:[#allocation3 + $0x10] sm:$0xff]
    %v238 = vld [vmem:[#allocation3 + $0x18] sm:$0xff]
    %v239 = vld [vmem:[#allocation3 + $0x20] sm:$0xff]
    %v240 = vld [vmem:[#allocation3 + $0x28] sm:$0xff]
    %v241 = vld [vmem:[#allocation3 + $0x30] sm:$0xff]
    %v242 = vld [vmem:[#allocation3 + $0x38] sm:$0xff]
    %v243 = vld [vmem:[#allocation3 + $0x40] sm:$0xff]
    %v244 = vld [vmem:[#allocation3 + $0x48] sm:$0xff]
    %v245 = vld [vmem:[#allocation3 + $0x50] sm:$0xff]
    %v246 = vld [vmem:[#allocation3 + $0x58] sm:$0xff]
    %v247 = vld [vmem:[#allocation3 + $0x60] sm:$0xff]
    %v248 = vld [vmem:[#allocation3 + $0x68] sm:$0xff]
    %v249 = vld [vmem:[#allocation3 + $0x70] sm:$0xff]
    %v250 = vld [vmem:[#allocation3 + $0x78] sm:$0xff]
    %v251 = vld [vmem:[%s4] sm:$0x1]
    %v253 = vlaneseq
    %v254 = vshrl.u32 %v253, 7
    %v255 = vsub.s32 0, %v254
    %v256 = vrot.slane %v251, %v255
    %258 = vmatprep.subr.mxu0 0.0
    %259 = vmatpush1.msra.mxu0 %v235
    %260 = vmatprep.subr.mxu0 0.0
    %261 = vmatpush1.msra.mxu0 %v236
    %262 = vmatprep.subr.mxu0 0.0
    %263 = vmatpush1.msra.mxu0 %v237
    %264 = vmatprep.subr.mxu0 0.0
    %265 = vmatpush1.msra.mxu0 %v238
    %266 = vmatprep.subr.mxu0 0.0
    %267 = vmatpush1.msra.mxu0 %v239
    %268 = vmatprep.subr.mxu0 0.0
    %269 = vmatpush1.msra.mxu0 %v240
    %270 = vmatprep.subr.mxu0 0.0
    %271 = vmatpush1.msra.mxu0 %v241
    %272 = vmatprep.subr.mxu0 0.0
    %273 = vmatpush1.msra.mxu0 %v242
    %274 = vmatprep.subr.mxu0 0.0
    %275 = vmatpush1.msra.mxu0 %v243
    %276 = vmatprep.subr.mxu0 0.0
    %277 = vmatpush1.msra.mxu0 %v244
    %278 = vmatprep.subr.mxu0 0.0
    %279 = vmatpush1.msra.mxu0 %v245
    %280 = vmatprep.subr.mxu0 0.0
    %281 = vmatpush1.msra.mxu0 %v246
    %282 = vmatprep.subr.mxu0 0.0
    %283 = vmatpush1.msra.mxu0 %v247
    %284 = vmatprep.subr.mxu0 0.0
    %285 = vmatpush1.msra.mxu0 %v248
    %286 = vmatprep.subr.mxu0 0.0
    %287 = vmatpush1.msra.mxu0 %v249
    %288 = vmatprep.subr.mxu0 0.0
    %289 = vmatpush1.msra.mxu0 %v250
    %290 = vmatprep.subr.mxu0 0.0
    %291 = vmatpush1.msra.mxu0 0.0
    %292 = vmatprep.subr.mxu0 0.0
    %293 = vmatpush1.msra.mxu0 0.0
    %294 = vmatprep.subr.mxu0 0.0
    %295 = vmatpush1.msra.mxu0 0.0
    %296 = vmatprep.subr.mxu0 0.0
    %297 = vmatpush1.msra.mxu0 0.0
    %298 = vmatprep.subr.mxu0 0.0
    %299 = vmatpush1.msra.mxu0 0.0
    %300 = vmatprep.subr.mxu0 0.0
    %301 = vmatpush1.msra.mxu0 0.0
    %302 = vmatprep.subr.mxu0 0.0
    %303 = vmatpush1.msra.mxu0 0.0
    %304 = vmatprep.subr.mxu0 0.0
    %305 = vmatpush1.msra.mxu0 0.0
    %306 = vmatprep.subr.mxu0 0.0
    %307 = vmatpush1.msra.mxu0 0.0
    %308 = vmatprep.subr.mxu0 0.0
    %309 = vmatpush1.msra.mxu0 0.0
    %310 = vmatprep.subr.mxu0 0.0
    %311 = vmatpush1.msra.mxu0 0.0
    %312 = vmatprep.subr.mxu0 0.0
    %313 = vmatpush1.msra.mxu0 0.0
    %314 = vmatprep.subr.mxu0 0.0
    %315 = vmatpush1.msra.mxu0 0.0
    %316 = vmatprep.subr.mxu0 0.0
    %317 = vmatpush1.msra.mxu0 0.0
    %318 = vmatprep.subr.mxu0 0.0
    %319 = vmatpush1.msra.mxu0 0.0
    %320 = vmatprep.subr.mxu0 0.0
    %321 = vmatpush1.msra.mxu0 0.0
    %322 = vmatprep.mubr.f32.mxu0 0.0
    %323 = vmatmul.mubr.f32.gmra.mrb[0].mxu0 %v233
    %v324 = vpop.f32.mrb[0].mxu0
    %v325 = vadd.f32 %v256, %v324
    %v326 = vpop.f32.mrb[0].mxu0
    %327 = vmatprep.mubr.f32.mxu0 0.0
    %328 = vmatmul.mubr.f32.gmra.mrb[0].mxu0 %v234
    %v329 = vpop.f32.mrb[0].mxu0
    %v330 = vadd.f32 %v256, %v329
    %v331 = vpop.f32.mrb[0].mxu0
    %332 = vdwg.mxu0
    %v333 = vmax.f32 %v325, 0.0
    %v334 = vmax.f32 %v330, 0.0
    %v335 = vld [vmem:[#allocation5] sm:$0xff]
    %v336 = vld [vmem:[#allocation5 + $0x8] sm:$0xff]
    %v337 = vld [vmem:[#allocation5 + $0x10] sm:$0xff]
    %v338 = vld [vmem:[#allocation5 + $0x18] sm:$0xff]
    %v339 = vld [vmem:[#allocation5 + $0x20] sm:$0xff]
    %v340 = vld [vmem:[#allocation5 + $0x28] sm:$0xff]
    %v341 = vld [vmem:[#allocation5 + $0x30] sm:$0xff]
    %v342 = vld [vmem:[#allocation5 + $0x38] sm:$0xff]
    %v343 = vld [vmem:[#allocation5 + $0x40] sm:$0xff]
    %v344 = vld [vmem:[#allocation5 + $0x48] sm:$0xff]
    %v345 = vld [vmem:[#allocation5 + $0x50] sm:$0xff]
    %v346 = vld [vmem:[#allocation5 + $0x58] sm:$0xff]
    %v347 = vld [vmem:[#allocation5 + $0x60] sm:$0xff]
    %v348 = vld [vmem:[#allocation5 + $0x68] sm:$0xff]
    %v349 = vld [vmem:[#allocation5 + $0x70] sm:$0xff]
    %v350 = vld [vmem:[#allocation5 + $0x78] sm:$0xff]
    %v351 = vld [vmem:[%s6] sm:$0x1]
    %v353 = vlaneseq
    %v354 = vshrl.u32 %v353, 7
    %v355 = vsub.s32 0, %v354
    %v356 = vrot.slane %v351, %v355
    %358 = vmatprep.subr.mxu0 0.0
    %359 = vmatpush1.msra.mxu0 %v335
    %360 = vmatprep.subr.mxu0 0.0
    %361 = vmatpush1.msra.mxu0 %v336
    %362 = vmatprep.subr.mxu0 0.0
    %363 = vmatpush1.msra.mxu0 %v337
    %364 = vmatprep.subr.mxu0 0.0
    %365 = vmatpush1.msra.mxu0 %v338
    %366 = vmatprep.subr.mxu0 0.0
    %367 = vmatpush1.msra.mxu0 %v339
    %368 = vmatprep.subr.mxu0 0.0
    %369 = vmatpush1.msra.mxu0 %v340
    %370 = vmatprep.subr.mxu0 0.0
    %371 = vmatpush1.msra.mxu0 %v341
    %372 = vmatprep.subr.mxu0 0.0
    %373 = vmatpush1.msra.mxu0 %v342
    %374 = vmatprep.subr.mxu0 0.0
    %375 = vmatpush1.msra.mxu0 %v343
    %376 = vmatprep.subr.mxu0 0.0
    %377 = vmatpush1.msra.mxu0 %v344
    %378 = vmatprep.subr.mxu0 0.0
    %379 = vmatpush1.msra.mxu0 %v345
    %380 = vmatprep.subr.mxu0 0.0
    %381 = vmatpush1.msra.mxu0 %v346
    %382 = vmatprep.subr.mxu0 0.0
    %383 = vmatpush1.msra.mxu0 %v347
    %384 = vmatprep.subr.mxu0 0.0
    %385 = vmatpush1.msra.mxu0 %v348
    %386 = vmatprep.subr.mxu0 0.0
    %387 = vmatpush1.msra.mxu0 %v349
    %388 = vmatprep.subr.mxu0 0.0
    %389 = vmatpush1.msra.mxu0 %v350
    %390 = vmatprep.subr.mxu0 0.0
    %391 = vmatpush1.msra.mxu0 0.0
    %392 = vmatprep.subr.mxu0 0.0
    %393 = vmatpush1.msra.mxu0 0.0
    %394 = vmatprep.subr.mxu0 0.0
    %395 = vmatpush1.msra.mxu0 0.0
    %396 = vmatprep.subr.mxu0 0.0
    %397 = vmatpush1.msra.mxu0 0.0
    %398 = vmatprep.subr.mxu0 0.0
    %399 = vmatpush1.msra.mxu0 0.0
    %400 = vmatprep.subr.mxu0 0.0
    %401 = vmatpush1.msra.mxu0 0.0
    %402 = vmatprep.subr.mxu0 0.0
    %403 = vmatpush1.msra.mxu0 0.0
    %404 = vmatprep.subr.mxu0 0.0
    %405 = vmatpush1.msra.mxu0 0.0
    %406 = vmatprep.subr.mxu0 0.0
    %407 = vmatpush1.msra.mxu0 0.0
    %408 = vmatprep.subr.mxu0 0.0
    %409 = vmatpush1.msra.mxu0 0.0
    %410 = vmatprep.subr.mxu0 0.0
    %411 = vmatpush1.msra.mxu0 0.0
    %412 = vmatprep.subr.mxu0 0.0
    %413 = vmatpush1.msra.mxu0 0.0
    %414 = vmatprep.subr.mxu0 0.0
    %415 = vmatpush1.msra.mxu0 0.0
    %416 = vmatprep.subr.mxu0 0.0
    %417 = vmatpush1.msra.mxu0 0.0
    %418 = vmatprep.subr.mxu0 0.0
    %419 = vmatpush1.msra.mxu0 0.0
    %420 = vmatprep.subr.mxu0 0.0
    %421 = vmatpush1.msra.mxu0 0.0
    %422 = vmatprep.mubr.f32.mxu0 0.0
    %423 = vmatmul.mubr.f32.gmra.mrb[0].mxu0 %v333
    %v424 = vpop.f32.mrb[0].mxu0
    %v425 = vadd.f32 %v356, %v424
    %v426 = vpop.f32.mrb[0].mxu0
    %427 = vmatprep.mubr.f32.mxu0 0.0
    %428 = vmatmul.mubr.f32.gmra.mrb[0].mxu0 %v334
    %v429 = vpop.f32.mrb[0].mxu0
    %v430 = vadd.f32 %v356, %v429
    %v431 = vpop.f32.mrb[0].mxu0
    %432 = vdwg.mxu0
    %v433 = vmax.f32 %v425, 0.0
    %v434 = vmax.f32 %v430, 0.0
    %v435 = vld [vmem:[#allocation7] sm:$0xff]
    %v436 = vld [vmem:[#allocation7 + $0x8] sm:$0xff]
    %v437 = vld [vmem:[#allocation7 + $0x10] sm:$0xff]
    %v438 = vld [vmem:[#allocation7 + $0x18] sm:$0xff]
    %v439 = vld [vmem:[#allocation7 + $0x20] sm:$0xff]
    %v440 = vld [vmem:[#allocation7 + $0x28] sm:$0xff]
    %v441 = vld [vmem:[#allocation7 + $0x30] sm:$0xff]
    %v442 = vld [vmem:[#allocation7 + $0x38] sm:$0xff]
    %v443 = vld [vmem:[#allocation7 + $0x40] sm:$0xff]
    %v444 = vld [vmem:[#allocation7 + $0x48] sm:$0xff]
    %v445 = vld [vmem:[#allocation7 + $0x50] sm:$0xff]
    %v446 = vld [vmem:[#allocation7 + $0x58] sm:$0xff]
    %v447 = vld [vmem:[#allocation7 + $0x60] sm:$0xff]
    %v448 = vld [vmem:[#allocation7 + $0x68] sm:$0xff]
    %v449 = vld [vmem:[#allocation7 + $0x70] sm:$0xff]
    %v450 = vld [vmem:[#allocation7 + $0x78] sm:$0xff]
    %v451 = vld [vmem:[%s8] sm:$0x1]
    %v453 = vlaneseq
    %v454 = vshrl.u32 %v453, 7
    %v455 = vsub.s32 0, %v454
    %v456 = vrot.slane %v451, %v455
    %458 = vmatprep.subr.mxu0 0.0
    %459 = vmatpush1.msra.mxu0 %v435
    %460 = vmatprep.subr.mxu0 0.0
    %461 = vmatpush1.msra.mxu0 %v436
    %462 = vmatprep.subr.mxu0 0.0
    %463 = vmatpush1.msra.mxu0 %v437
    %464 = vmatprep.subr.mxu0 0.0
    %465 = vmatpush1.msra.mxu0 %v438
    %466 = vmatprep.subr.mxu0 0.0
    %467 = vmatpush1.msra.mxu0 %v439
    %468 = vmatprep.subr.mxu0 0.0
    %469 = vmatpush1.msra.mxu0 %v440
    %470 = vmatprep.subr.mxu0 0.0
    %471 = vmatpush1.msra.mxu0 %v441
    %472 = vmatprep.subr.mxu0 0.0
    %473 = vmatpush1.msra.mxu0 %v442
    %474 = vmatprep.subr.mxu0 0.0
    %475 = vmatpush1.msra.mxu0 %v443
    %476 = vmatprep.subr.mxu0 0.0
    %477 = vmatpush1.msra.mxu0 %v444
    %478 = vmatprep.subr.mxu0 0.0
    %479 = vmatpush1.msra.mxu0 %v445
    %480 = vmatprep.subr.mxu0 0.0
    %481 = vmatpush1.msra.mxu0 %v446
    %482 = vmatprep.subr.mxu0 0.0
    %483 = vmatpush1.msra.mxu0 %v447
    %484 = vmatprep.subr.mxu0 0.0
    %485 = vmatpush1.msra.mxu0 %v448
    %486 = vmatprep.subr.mxu0 0.0
    %487 = vmatpush1.msra.mxu0 %v449
    %488 = vmatprep.subr.mxu0 0.0
    %489 = vmatpush1.msra.mxu0 %v450
    %490 = vmatprep.subr.mxu0 0.0
    %491 = vmatpush1.msra.mxu0 0.0
    %492 = vmatprep.subr.mxu0 0.0
    %493 = vmatpush1.msra.mxu0 0.0
    %494 = vmatprep.subr.mxu0 0.0
    %495 = vmatpush1.msra.mxu0 0.0
    %496 = vmatprep.subr.mxu0 0.0
    %497 = vmatpush1.msra.mxu0 0.0
    %498 = vmatprep.subr.mxu0 0.0
    %499 = vmatpush1.msra.mxu0 0.0
    %500 = vmatprep.subr.mxu0 0.0
    %501 = vmatpush1.msra.mxu0 0.0
    %502 = vmatprep.subr.mxu0 0.0
    %503 = vmatpush1.msra.mxu0 0.0
    %504 = vmatprep.subr.mxu0 0.0
    %505 = vmatpush1.msra.mxu0 0.0
    %506 = vmatprep.subr.mxu0 0.0
    %507 = vmatpush1.msra.mxu0 0.0
    %508 = vmatprep.subr.mxu0 0.0
    %509 = vmatpush1.msra.mxu0 0.0
    %510 = vmatprep.subr.mxu0 0.0
    %511 = vmatpush1.msra.mxu0 0.0
    %512 = vmatprep.subr.mxu0 0.0
    %513 = vmatpush1.msra.mxu0 0.0
    %514 = vmatprep.subr.mxu0 0.0
    %515 = vmatpush1.msra.mxu0 0.0
    %516 = vmatprep.subr.mxu0 0.0
    %517 = vmatpush1.msra.mxu0 0.0
    %518 = vmatprep.subr.mxu0 0.0
    %519 = vmatpush1.msra.mxu0 0.0
    %520 = vmatprep.subr.mxu0 0.0
    %521 = vmatpush1.msra.mxu0 0.0
    %522 = vmatprep.mubr.f32.mxu0 0.0
    %523 = vmatmul.mubr.f32.gmra.mrb[0].mxu0 %v433
    %v524 = vpop.f32.mrb[0].mxu0
    %v525 = vadd.f32 %v456, %v524
    %v526 = vpop.f32.mrb[0].mxu0
    %527 = vmatprep.mubr.f32.mxu0 0.0
    %528 = vmatmul.mubr.f32.gmra.mrb[0].mxu0 %v434
    %v529 = vpop.f32.mrb[0].mxu0
    %v530 = vadd.f32 %v456, %v529
    %v531 = vpop.f32.mrb[0].mxu0
    %532 = vdwg.mxu0
    %v533 = vld [vmem:[%s1] sm:$0xff]
    %v534 = vld [vmem:[%s1 + $0x8] sm:$0xff]
    %v535 = vld [vmem:[#allocation8] sm:$0xff]
    %v536 = vld [vmem:[#allocation8 + $0x8] sm:$0xff]
    %v537 = vld [vmem:[#allocation8 + $0x10] sm:$0xff]
    %v538 = vld [vmem:[#allocation8 + $0x18] sm:$0xff]
    %v539 = vld [vmem:[#allocation8 + $0x20] sm:$0xff]
    %v540 = vld [vmem:[#allocation8 + $0x28] sm:$0xff]
    %v541 = vld [vmem:[#allocation8 + $0x30] sm:$0xff]
    %v542 = vld [vmem:[#allocation8 + $0x38] sm:$0xff]
    %v543 = vld [vmem:[#allocation8 + $0x40] sm:$0xff]
    %v544 = vld [vmem:[#allocation8 + $0x48] sm:$0xff]
    %v545 = vld [vmem:[#allocation8 + $0x50] sm:$0xff]
    %v546 = vld [vmem:[#allocation8 + $0x58] sm:$0xff]
    %v547 = vld [vmem:[#allocation8 + $0x60] sm:$0xff]
    %v548 = vld [vmem:[#allocation8 + $0x68] sm:$0xff]
    %v549 = vld [vmem:[#allocation8 + $0x70] sm:$0xff]
    %v550 = vld [vmem:[#allocation8 + $0x78] sm:$0xff]
    %v551 = vld [vmem:[#allocation10] sm:$0xff]
    %v552 = vld [vmem:[#allocation10 + $0x8] sm:$0xff]
    %v553 = vld [vmem:[#allocation10 + $0x10] sm:$0xff]
    %v554 = vld [vmem:[#allocation10 + $0x18] sm:$0xff]
    %v555 = vld [vmem:[#allocation10 + $0x20] sm:$0xff]
    %v556 = vld [vmem:[#allocation10 + $0x28] sm:$0xff]
    %v557 = vld [vmem:[#allocation10 + $0x30] sm:$0xff]
    %v558 = vld [vmem:[#allocation10 + $0x38] sm:$0xff]
    %v559 = vld [vmem:[#allocation10 + $0x40] sm:$0xff]
    %v560 = vld [vmem:[#allocation10 + $0x48] sm:$0xff]
    %v561 = vld [vmem:[#allocation10 + $0x50] sm:$0xff]
    %v562 = vld [vmem:[#allocation10 + $0x58] sm:$0xff]
    %v563 = vld [vmem:[#allocation10 + $0x60] sm:$0xff]
    %v564 = vld [vmem:[#allocation10 + $0x68] sm:$0xff]
    %v565 = vld [vmem:[#allocation10 + $0x70] sm:$0xff]
    %v566 = vld [vmem:[#allocation10 + $0x78] sm:$0xff]
    %567 = vmatprep.subr.mxu0 0.0
    %568 = vmatpush1.msra.mxu0 %v551
    %569 = vmatprep.subr.mxu0 0.0
    %570 = vmatpush1.msra.mxu0 %v552
    %571 = vmatprep.subr.mxu0 0.0
    %572 = vmatpush1.msra.mxu0 %v553
    %573 = vmatprep.subr.mxu0 0.0
    %574 = vmatpush1.msra.mxu0 %v554
    %575 = vmatprep.subr.mxu0 0.0
    %576 = vmatpush1.msra.mxu0 %v555
    %577 = vmatprep.subr.mxu0 0.0
    %578 = vmatpush1.msra.mxu0 %v556
    %579 = vmatprep.subr.mxu0 0.0
    %580 = vmatpush1.msra.mxu0 %v557
    %581 = vmatprep.subr.mxu0 0.0
    %582 = vmatpush1.msra.mxu0 %v558
    %583 = vmatprep.subr.mxu0 0.0
    %584 = vmatpush1.msra.mxu0 %v559
    %585 = vmatprep.subr.mxu0 0.0
    %586 = vmatpush1.msra.mxu0 %v560
    %587 = vmatprep.subr.mxu0 0.0
    %588 = vmatpush1.msra.mxu0 %v561
    %589 = vmatprep.subr.mxu0 0.0
    %590 = vmatpush1.msra.mxu0 %v562
    %591 = vmatprep.subr.mxu0 0.0
    %592 = vmatpush1.msra.mxu0 %v563
    %593 = vmatprep.subr.mxu0 0.0
    %594 = vmatpush1.msra.mxu0 %v564
    %595 = vmatprep.subr.mxu0 0.0
    %596 = vmatpush1.msra.mxu0 %v565
    %597 = vmatprep.subr.mxu0 0.0
    %598 = vmatpush1.msra.mxu0 %v566
    %599 = vmatprep.subr.mxu0 0.0
    %600 = vmatpush1.msra.mxu0 0.0
    %601 = vmatprep.subr.mxu0 0.0
    %602 = vmatpush1.msra.mxu0 0.0
    %603 = vmatprep.subr.mxu0 0.0
    %604 = vmatpush1.msra.mxu0 0.0
    %605 = vmatprep.subr.mxu0 0.0
    %606 = vmatpush1.msra.mxu0 0.0
    %607 = vmatprep.subr.mxu0 0.0
    %608 = vmatpush1.msra.mxu0 0.0
    %609 = vmatprep.subr.mxu0 0.0
    %610 = vmatpush1.msra.mxu0 0.0
    %611 = vmatprep.subr.mxu0 0.0
    %612 = vmatpush1.msra.mxu0 0.0
    %613 = vmatprep.subr.mxu0 0.0
    %614 = vmatpush1.msra.mxu0 0.0
    %615 = vmatprep.subr.mxu0 0.0
    %616 = vmatpush1.msra.mxu0 0.0
    %617 = vmatprep.subr.mxu0 0.0
    %618 = vmatpush1.msra.mxu0 0.0
    %619 = vmatprep.subr.mxu0 0.0
    %620 = vmatpush1.msra.mxu0 0.0
    %621 = vmatprep.subr.mxu0 0.0
    %622 = vmatpush1.msra.mxu0 0.0
    %623 = vmatprep.subr.mxu0 0.0
    %624 = vmatpush1.msra.mxu0 0.0
    %625 = vmatprep.subr.mxu0 0.0
    %626 = vmatpush1.msra.mxu0 0.0
    %627 = vmatprep.subr.mxu0 0.0
    %628 = vmatpush1.msra.mxu0 0.0
    %629 = vmatprep.subr.mxu0 0.0
    %630 = vmatpush1.msra.mxu0 0.0
    %631 = vmatprep.mubr.f32.mxu0 0.0
    %632 = vmatmul.mubr.f32.gmra.mrb[0].mxu0 %v533
    %v633 = vpop.f32.mrb[0].mxu0
    %v634 = vadd.f32 0.0, %v633
    %v635 = vpop.f32.mrb[0].mxu0
    %636 = vmatprep.mubr.f32.mxu0 0.0
    %637 = vmatmul.mubr.f32.gmra.mrb[0].mxu0 %v534
    %v638 = vpop.f32.mrb[0].mxu0
    %v639 = vadd.f32 0.0, %v638
    %v640 = vpop.f32.mrb[0].mxu0
    %641 = vdwg.mxu0
    %642 = vmatprep.subr.mxu0 0.0
    %643 = vmatpush1.msra.mxu0 %v535
    %644 = vmatprep.subr.mxu0 0.0
    %645 = vmatpush1.msra.mxu0 %v536
    %646 = vmatprep.subr.mxu0 0.0
    %647 = vmatpush1.msra.mxu0 %v537
    %648 = vmatprep.subr.mxu0 0.0
    %649 = vmatpush1.msra.mxu0 %v538
    %650 = vmatprep.subr.mxu0 0.0
    %651 = vmatpush1.msra.mxu0 %v539
    %652 = vmatprep.subr.mxu0 0.0
    %653 = vmatpush1.msra.mxu0 %v540
    %654 = vmatprep.subr.mxu0 0.0
    %655 = vmatpush1.msra.mxu0 %v541
    %656 = vmatprep.subr.mxu0 0.0
    %657 = vmatpush1.msra.mxu0 %v542
    %658 = vmatprep.subr.mxu0 0.0
    %659 = vmatpush1.msra.mxu0 %v543
    %660 = vmatprep.subr.mxu0 0.0
    %661 = vmatpush1.msra.mxu0 %v544
    %662 = vmatprep.subr.mxu0 0.0
    %663 = vmatpush1.msra.mxu0 %v545
    %664 = vmatprep.subr.mxu0 0.0
    %665 = vmatpush1.msra.mxu0 %v546
    %666 = vmatprep.subr.mxu0 0.0
    %667 = vmatpush1.msra.mxu0 %v547
    %668 = vmatprep.subr.mxu0 0.0
    %669 = vmatpush1.msra.mxu0 %v548
    %670 = vmatprep.subr.mxu0 0.0
    %671 = vmatpush1.msra.mxu0 %v549
    %672 = vmatprep.subr.mxu0 0.0
    %673 = vmatpush1.msra.mxu0 %v550
    %674 = vmatprep.subr.mxu0 0.0
    %675 = vmatpush1.msra.mxu0 0.0
    %676 = vmatprep.subr.mxu0 0.0
    %677 = vmatpush1.msra.mxu0 0.0
    %678 = vmatprep.subr.mxu0 0.0
    %679 = vmatpush1.msra.mxu0 0.0
    %680 = vmatprep.subr.mxu0 0.0
    %681 = vmatpush1.msra.mxu0 0.0
    %682 = vmatprep.subr.mxu0 0.0
    %683 = vmatpush1.msra.mxu0 0.0
    %684 = vmatprep.subr.mxu0 0.0
    %685 = vmatpush1.msra.mxu0 0.0
    %686 = vmatprep.subr.mxu0 0.0
    %687 = vmatpush1.msra.mxu0 0.0
    %688 = vmatprep.subr.mxu0 0.0
    %689 = vmatpush1.msra.mxu0 0.0
    %690 = vmatprep.subr.mxu0 0.0
    %691 = vmatpush1.msra.mxu0 0.0
    %692 = vmatprep.subr.mxu0 0.0
    %693 = vmatpush1.msra.mxu0 0.0
    %694 = vmatprep.subr.mxu0 0.0
    %695 = vmatpush1.msra.mxu0 0.0
    %696 = vmatprep.subr.mxu0 0.0
    %697 = vmatpush1.msra.mxu0 0.0
    %698 = vmatprep.subr.mxu0 0.0
    %699 = vmatpush1.msra.mxu0 0.0
    %700 = vmatprep.subr.mxu0 0.0
    %701 = vmatpush1.msra.mxu0 0.0
    %702 = vmatprep.subr.mxu0 0.0
    %703 = vmatpush1.msra.mxu0 0.0
    %704 = vmatprep.subr.mxu0 0.0
    %705 = vmatpush1.msra.mxu0 0.0
    %706 = vmatprep.mubr.f32.mxu0 0.0
    %707 = vmatmul.mubr.f32.gmra.mrb[0].mxu0 %v525
    %v708 = vpop.f32.mrb[0].mxu0
    %v709 = vadd.f32 %v634, %v708
    %v710 = vpop.f32.mrb[0].mxu0
    %711 = vmatprep.mubr.f32.mxu0 0.0
    %712 = vmatmul.mubr.f32.gmra.mrb[0].mxu0 %v530
    %v713 = vpop.f32.mrb[0].mxu0
    %v714 = vadd.f32 %v639, %v713
    %v715 = vpop.f32.mrb[0].mxu0
    %716 = vdwg.mxu0
    %v717 = vld [vmem:[%s11] sm:$0x1]
    %v719 = vlaneseq
    %v720 = vshrl.u32 %v719, 7
    %v721 = vsub.s32 0, %v720
    %v722 = vrot.slane %v717, %v721
    %v724 = vadd.f32 %v709, %v722
    %v725 = vadd.f32 %v714, %v722
    %v726 = vmax.f32 %v724, 0.0
    %v727 = vmax.f32 %v725, 0.0
    %v728 = vld [vmem:[#allocation11] sm:$0xff]
    %v729 = vld [vmem:[#allocation11 + $0x8] sm:$0xff]
    %v730 = vld [vmem:[#allocation11 + $0x10] sm:$0xff]
    %v731 = vld [vmem:[#allocation11 + $0x18] sm:$0xff]
    %v732 = vld [vmem:[#allocation11 + $0x20] sm:$0xff]
    %v733 = vld [vmem:[#allocation11 + $0x28] sm:$0xff]
    %v734 = vld [vmem:[#allocation11 + $0x30] sm:$0xff]
    %v735 = vld [vmem:[#allocation11 + $0x38] sm:$0xff]
    %v736 = vld [vmem:[#allocation11 + $0x40] sm:$0xff]
    %v737 = vld [vmem:[#allocation11 + $0x48] sm:$0xff]
    %v738 = vld [vmem:[#allocation11 + $0x50] sm:$0xff]
    %v739 = vld [vmem:[#allocation11 + $0x58] sm:$0xff]
    %v740 = vld [vmem:[#allocation11 + $0x60] sm:$0xff]
    %v741 = vld [vmem:[#allocation11 + $0x68] sm:$0xff]
    %v742 = vld [vmem:[#allocation11 + $0x70] sm:$0xff]
    %v743 = vld [vmem:[#allocation11 + $0x78] sm:$0xff]
    %v744 = vld [vmem:[%s13] sm:$0x1]
    %v746 = vlaneseq
    %v747 = vshrl.u32 %v746, 7
    %v748 = vsub.s32 0, %v747
    %v749 = vrot.slane %v744, %v748
    %751 = vmatprep.subr.mxu0 0.0
    %752 = vmatpush1.msra.mxu0 %v728
    %753 = vmatprep.subr.mxu0 0.0
    %754 = vmatpush1.msra.mxu0 %v729
    %755 = vmatprep.subr.mxu0 0.0
    %756 = vmatpush1.msra.mxu0 %v730
    %757 = vmatprep.subr.mxu0 0.0
    %758 = vmatpush1.msra.mxu0 %v731
    %759 = vmatprep.subr.mxu0 0.0
    %760 = vmatpush1.msra.mxu0 %v732
    %761 = vmatprep.subr.mxu0 0.0
    %762 = vmatpush1.msra.mxu0 %v733
    %763 = vmatprep.subr.mxu0 0.0
    %764 = vmatpush1.msra.mxu0 %v734
    %765 = vmatprep.subr.mxu0 0.0
    %766 = vmatpush1.msra.mxu0 %v735
    %767 = vmatprep.subr.mxu0 0.0
    %768 = vmatpush1.msra.mxu0 %v736
    %769 = vmatprep.subr.mxu0 0.0
    %770 = vmatpush1.msra.mxu0 %v737
    %771 = vmatprep.subr.mxu0 0.0
    %772 = vmatpush1.msra.mxu0 %v738
    %773 = vmatprep.subr.mxu0 0.0
    %774 = vmatpush1.msra.mxu0 %v739
    %775 = vmatprep.subr.mxu0 0.0
    %776 = vmatpush1.msra.mxu0 %v740
    %777 = vmatprep.subr.mxu0 0.0
    %778 = vmatpush1.msra.mxu0 %v741
    %779 = vmatprep.subr.mxu0 0.0
    %780 = vmatpush1.msra.mxu0 %v742
    %781 = vmatprep.subr.mxu0 0.0
    %782 = vmatpush1.msra.mxu0 %v743
    %783 = vmatprep.subr.mxu0 0.0
    %784 = vmatpush1.msra.mxu0 0.0
    %785 = vmatprep.subr.mxu0 0.0
    %786 = vmatpush1.msra.mxu0 0.0
    %787 = vmatprep.subr.mxu0 0.0
    %788 = vmatpush1.msra.mxu0 0.0
    %789 = vmatprep.subr.mxu0 0.0
    %790 = vmatpush1.msra.mxu0 0.0
    %791 = vmatprep.subr.mxu0 0.0
    %792 = vmatpush1.msra.mxu0 0.0
    %793 = vmatprep.subr.mxu0 0.0
    %794 = vmatpush1.msra.mxu0 0.0
    %795 = vmatprep.subr.mxu0 0.0
    %796 = vmatpush1.msra.mxu0 0.0
    %797 = vmatprep.subr.mxu0 0.0
    %798 = vmatpush1.msra.mxu0 0.0
    %799 = vmatprep.subr.mxu0 0.0
    %800 = vmatpush1.msra.mxu0 0.0
    %801 = vmatprep.subr.mxu0 0.0
    %802 = vmatpush1.msra.mxu0 0.0
    %803 = vmatprep.subr.mxu0 0.0
    %804 = vmatpush1.msra.mxu0 0.0
    %805 = vmatprep.subr.mxu0 0.0
    %806 = vmatpush1.msra.mxu0 0.0
    %807 = vmatprep.subr.mxu0 0.0
    %808 = vmatpush1.msra.mxu0 0.0
    %809 = vmatprep.subr.mxu0 0.0
    %810 = vmatpush1.msra.mxu0 0.0
    %811 = vmatprep.subr.mxu0 0.0
    %812 = vmatpush1.msra.mxu0 0.0
    %813 = vmatprep.subr.mxu0 0.0
    %814 = vmatpush1.msra.mxu0 0.0
    %815 = vmatprep.mubr.f32.mxu0 0.0
    %816 = vmatmul.mubr.f32.gmra.mrb[0].mxu0 %v726
    %v817 = vpop.f32.mrb[0].mxu0
    %v818 = vadd.f32 %v749, %v817
    %v819 = vpop.f32.mrb[0].mxu0
    %820 = vmatprep.mubr.f32.mxu0 0.0
    %821 = vmatmul.mubr.f32.gmra.mrb[0].mxu0 %v727
    %v822 = vpop.f32.mrb[0].mxu0
    %v823 = vadd.f32 %v749, %v822
    %v824 = vpop.f32.mrb[0].mxu0
    %825 = vdwg.mxu0
    %v826 = vmax.f32 %v818, 0.0
    %v827 = vmax.f32 %v823, 0.0
    %v828 = vld [vmem:[#allocation13] sm:$0xff]
    %v829 = vld [vmem:[#allocation13 + $0x8] sm:$0xff]
    %v830 = vld [vmem:[#allocation13 + $0x10] sm:$0xff]
    %v831 = vld [vmem:[#allocation13 + $0x18] sm:$0xff]
    %v832 = vld [vmem:[#allocation13 + $0x20] sm:$0xff]
    %v833 = vld [vmem:[#allocation13 + $0x28] sm:$0xff]
    %v834 = vld [vmem:[#allocation13 + $0x30] sm:$0xff]
    %v835 = vld [vmem:[#allocation13 + $0x38] sm:$0xff]
    %v836 = vld [vmem:[#allocation13 + $0x40] sm:$0xff]
    %v837 = vld [vmem:[#allocation13 + $0x48] sm:$0xff]
    %v838 = vld [vmem:[#allocation13 + $0x50] sm:$0xff]
    %v839 = vld [vmem:[#allocation13 + $0x58] sm:$0xff]
    %v840 = vld [vmem:[#allocation13 + $0x60] sm:$0xff]
    %v841 = vld [vmem:[#allocation13 + $0x68] sm:$0xff]
    %v842 = vld [vmem:[#allocation13 + $0x70] sm:$0xff]
    %v843 = vld [vmem:[#allocation13 + $0x78] sm:$0xff]
    %v844 = vld [vmem:[%s15] sm:$0x1]
    %v846 = vlaneseq
    %v847 = vshrl.u32 %v846, 7
    %v848 = vsub.s32 0, %v847
    %v849 = vrot.slane %v844, %v848
    %851 = vmatprep.subr.mxu0 0.0
    %852 = vmatpush1.msra.mxu0 %v828
    %853 = vmatprep.subr.mxu0 0.0
    %854 = vmatpush1.msra.mxu0 %v829
    %855 = vmatprep.subr.mxu0 0.0
    %856 = vmatpush1.msra.mxu0 %v830
    %857 = vmatprep.subr.mxu0 0.0
    %858 = vmatpush1.msra.mxu0 %v831
    %859 = vmatprep.subr.mxu0 0.0
    %860 = vmatpush1.msra.mxu0 %v832
    %861 = vmatprep.subr.mxu0 0.0
    %862 = vmatpush1.msra.mxu0 %v833
    %863 = vmatprep.subr.mxu0 0.0
    %864 = vmatpush1.msra.mxu0 %v834
    %865 = vmatprep.subr.mxu0 0.0
    %866 = vmatpush1.msra.mxu0 %v835
    %867 = vmatprep.subr.mxu0 0.0
    %868 = vmatpush1.msra.mxu0 %v836
    %869 = vmatprep.subr.mxu0 0.0
    %870 = vmatpush1.msra.mxu0 %v837
    %871 = vmatprep.subr.mxu0 0.0
    %872 = vmatpush1.msra.mxu0 %v838
    %873 = vmatprep.subr.mxu0 0.0
    %874 = vmatpush1.msra.mxu0 %v839
    %875 = vmatprep.subr.mxu0 0.0
    %876 = vmatpush1.msra.mxu0 %v840
    %877 = vmatprep.subr.mxu0 0.0
    %878 = vmatpush1.msra.mxu0 %v841
    %879 = vmatprep.subr.mxu0 0.0
    %880 = vmatpush1.msra.mxu0 %v842
    %881 = vmatprep.subr.mxu0 0.0
    %882 = vmatpush1.msra.mxu0 %v843
    %883 = vmatprep.subr.mxu0 0.0
    %884 = vmatpush1.msra.mxu0 0.0
    %885 = vmatprep.subr.mxu0 0.0
    %886 = vmatpush1.msra.mxu0 0.0
    %887 = vmatprep.subr.mxu0 0.0
    %888 = vmatpush1.msra.mxu0 0.0
    %889 = vmatprep.subr.mxu0 0.0
    %890 = vmatpush1.msra.mxu0 0.0
    %891 = vmatprep.subr.mxu0 0.0
    %892 = vmatpush1.msra.mxu0 0.0
    %893 = vmatprep.subr.mxu0 0.0
    %894 = vmatpush1.msra.mxu0 0.0
    %895 = vmatprep.subr.mxu0 0.0
    %896 = vmatpush1.msra.mxu0 0.0
    %897 = vmatprep.subr.mxu0 0.0
    %898 = vmatpush1.msra.mxu0 0.0
    %899 = vmatprep.subr.mxu0 0.0
    %900 = vmatpush1.msra.mxu0 0.0
    %901 = vmatprep.subr.mxu0 0.0
    %902 = vmatpush1.msra.mxu0 0.0
    %903 = vmatprep.subr.mxu0 0.0
    %904 = vmatpush1.msra.mxu0 0.0
    %905 = vmatprep.subr.mxu0 0.0
    %906 = vmatpush1.msra.mxu0 0.0
    %907 = vmatprep.subr.mxu0 0.0
    %908 = vmatpush1.msra.mxu0 0.0
    %909 = vmatprep.subr.mxu0 0.0
    %910 = vmatpush1.msra.mxu0 0.0
    %911 = vmatprep.subr.mxu0 0.0
    %912 = vmatpush1.msra.mxu0 0.0
    %913 = vmatprep.subr.mxu0 0.0
    %914 = vmatpush1.msra.mxu0 0.0
    %915 = vmatprep.mubr.f32.mxu0 0.0
    %916 = vmatmul.mubr.f32.gmra.mrb[0].mxu0 %v826
    %v917 = vpop.f32.mrb[0].mxu0
    %v918 = vadd.f32 %v849, %v917
    %v919 = vpop.f32.mrb[0].mxu0
    %920 = vmatprep.mubr.f32.mxu0 0.0
    %921 = vmatmul.mubr.f32.gmra.mrb[0].mxu0 %v827
    %v922 = vpop.f32.mrb[0].mxu0
    %v923 = vadd.f32 %v849, %v922
    %v924 = vpop.f32.mrb[0].mxu0
    %925 = vdwg.mxu0
    %v926 = vand.u32 2147483647, %v918
    %v927 = vand.u32 2147483647, %v923
    %s928 = sld [smem:[#allocation2]]
    %v929 = vstv %s928
    %v930 = vmul.f32 %v926, %v929
    %v931 = vmul.f32 %v927, %v929
    %932 = vst [vmem:[%s25] sm:$0xff] %v930
    %933 = vst [vmem:[%s25 + $0x8] sm:$0xff] %v931
    %v934 = vld [vmem:[#allocation14] sm:$0xff]
    %v935 = vld [vmem:[#allocation14 + $0x8] sm:$0xff]
    %v936 = vld [vmem:[#allocation14 + $0x10] sm:$0xff]
    %v937 = vld [vmem:[#allocation14 + $0x18] sm:$0xff]
    %v938 = vld [vmem:[#allocation14 + $0x20] sm:$0xff]
    %v939 = vld [vmem:[#allocation14 + $0x28] sm:$0xff]
    %v940 = vld [vmem:[#allocation14 + $0x30] sm:$0xff]
    %v941 = vld [vmem:[#allocation14 + $0x38] sm:$0xff]
    %v942 = vld [vmem:[#allocation14 + $0x40] sm:$0xff]
    %v943 = vld [vmem:[#allocation14 + $0x48] sm:$0xff]
    %v944 = vld [vmem:[#allocation14 + $0x50] sm:$0xff]
    %v945 = vld [vmem:[#allocation14 + $0x58] sm:$0xff]
    %v946 = vld [vmem:[#allocation14 + $0x60] sm:$0xff]
    %v947 = vld [vmem:[#allocation14 + $0x68] sm:$0xff]
    %v948 = vld [vmem:[#allocation14 + $0x70] sm:$0xff]
    %v949 = vld [vmem:[#allocation14 + $0x78] sm:$0xff]
    %v950 = vld [vmem:[#allocation16] sm:$0xff]
    %v951 = vld [vmem:[#allocation16 + $0x8] sm:$0xff]
    %v952 = vld [vmem:[#allocation16 + $0x10] sm:$0xff]
    %v953 = vld [vmem:[#allocation16 + $0x18] sm:$0xff]
    %v954 = vld [vmem:[#allocation16 + $0x20] sm:$0xff]
    %v955 = vld [vmem:[#allocation16 + $0x28] sm:$0xff]
    %v956 = vld [vmem:[#allocation16 + $0x30] sm:$0xff]
    %v957 = vld [vmem:[#allocation16 + $0x38] sm:$0xff]
    %v958 = vld [vmem:[#allocation16 + $0x40] sm:$0xff]
    %v959 = vld [vmem:[#allocation16 + $0x48] sm:$0xff]
    %v960 = vld [vmem:[#allocation16 + $0x50] sm:$0xff]
    %v961 = vld [vmem:[#allocation16 + $0x58] sm:$0xff]
    %v962 = vld [vmem:[#allocation16 + $0x60] sm:$0xff]
    %v963 = vld [vmem:[#allocation16 + $0x68] sm:$0xff]
    %v964 = vld [vmem:[#allocation16 + $0x70] sm:$0xff]
    %v965 = vld [vmem:[#allocation16 + $0x78] sm:$0xff]
    %966 = vmatprep.subr.mxu0 0.0
    %967 = vmatpush1.msra.mxu0 %v950
    %968 = vmatprep.subr.mxu0 0.0
    %969 = vmatpush1.msra.mxu0 %v951
    %970 = vmatprep.subr.mxu0 0.0
    %971 = vmatpush1.msra.mxu0 %v952
    %972 = vmatprep.subr.mxu0 0.0
    %973 = vmatpush1.msra.mxu0 %v953
    %974 = vmatprep.subr.mxu0 0.0
    %975 = vmatpush1.msra.mxu0 %v954
    %976 = vmatprep.subr.mxu0 0.0
    %977 = vmatpush1.msra.mxu0 %v955
    %978 = vmatprep.subr.mxu0 0.0
    %979 = vmatpush1.msra.mxu0 %v956
    %980 = vmatprep.subr.mxu0 0.0
    %981 = vmatpush1.msra.mxu0 %v957
    %982 = vmatprep.subr.mxu0 0.0
    %983 = vmatpush1.msra.mxu0 %v958
    %984 = vmatprep.subr.mxu0 0.0
    %985 = vmatpush1.msra.mxu0 %v959
    %986 = vmatprep.subr.mxu0 0.0
    %987 = vmatpush1.msra.mxu0 %v960
    %988 = vmatprep.subr.mxu0 0.0
    %989 = vmatpush1.msra.mxu0 %v961
    %990 = vmatprep.subr.mxu0 0.0
    %991 = vmatpush1.msra.mxu0 %v962
    %992 = vmatprep.subr.mxu0 0.0
    %993 = vmatpush1.msra.mxu0 %v963
    %994 = vmatprep.subr.mxu0 0.0
    %995 = vmatpush1.msra.mxu0 %v964
    %996 = vmatprep.subr.mxu0 0.0
    %997 = vmatpush1.msra.mxu0 %v965
    %998 = vmatprep.subr.mxu0 0.0
    %999 = vmatpush1.msra.mxu0 0.0
    %1000 = vmatprep.subr.mxu0 0.0
    %1001 = vmatpush1.msra.mxu0 0.0
    %1002 = vmatprep.subr.mxu0 0.0
    %1003 = vmatpush1.msra.mxu0 0.0
    %1004 = vmatprep.subr.mxu0 0.0
    %1005 = vmatpush1.msra.mxu0 0.0
    %1006 = vmatprep.subr.mxu0 0.0
    %1007 = vmatpush1.msra.mxu0 0.0
    %1008 = vmatprep.subr.mxu0 0.0
    %1009 = vmatpush1.msra.mxu0 0.0
    %1010 = vmatprep.subr.mxu0 0.0
    %1011 = vmatpush1.msra.mxu0 0.0
    %1012 = vmatprep.subr.mxu0 0.0
    %1013 = vmatpush1.msra.mxu0 0.0
    %1014 = vmatprep.subr.mxu0 0.0
    %1015 = vmatpush1.msra.mxu0 0.0
    %1016 = vmatprep.subr.mxu0 0.0
    %1017 = vmatpush1.msra.mxu0 0.0
    %1018 = vmatprep.subr.mxu0 0.0
    %1019 = vmatpush1.msra.mxu0 0.0
    %1020 = vmatprep.subr.mxu0 0.0
    %1021 = vmatpush1.msra.mxu0 0.0
    %1022 = vmatprep.subr.mxu0 0.0
    %1023 = vmatpush1.msra.mxu0 0.0
    %1024 = vmatprep.subr.mxu0 0.0
    %1025 = vmatpush1.msra.mxu0 0.0
    %1026 = vmatprep.subr.mxu0 0.0
    %1027 = vmatpush1.msra.mxu0 0.0
    %1028 = vmatprep.subr.mxu0 0.0
    %1029 = vmatpush1.msra.mxu0 0.0
    %1030 = vmatprep.mubr.f32.mxu0 0.0
    %1031 = vmatmul.mubr.f32.gmra.mrb[0].mxu0 %v533
    %v1032 = vpop.f32.mrb[0].mxu0
    %v1033 = vadd.f32 0.0, %v1032
    %v1034 = vpop.f32.mrb[0].mxu0
    %1035 = vmatprep.mubr.f32.mxu0 0.0
    %1036 = vmatmul.mubr.f32.gmra.mrb[0].mxu0 %v534
    %v1037 = vpop.f32.mrb[0].mxu0
    %v1038 = vadd.f32 0.0, %v1037
    %v1039 = vpop.f32.mrb[0].mxu0
    %1040 = vdwg.mxu0
    %1041 = vmatprep.subr.mxu0 0.0
    %1042 = vmatpush1.msra.mxu0 %v934
    %1043 = vmatprep.subr.mxu0 0.0
    %1044 = vmatpush1.msra.mxu0 %v935
    %1045 = vmatprep.subr.mxu0 0.0
    %1046 = vmatpush1.msra.mxu0 %v936
    %1047 = vmatprep.subr.mxu0 0.0
    %1048 = vmatpush1.msra.mxu0 %v937
    %1049 = vmatprep.subr.mxu0 0.0
    %1050 = vmatpush1.msra.mxu0 %v938
    %1051 = vmatprep.subr.mxu0 0.0
    %1052 = vmatpush1.msra.mxu0 %v939
    %1053 = vmatprep.subr.mxu0 0.0
    %1054 = vmatpush1.msra.mxu0 %v940
    %1055 = vmatprep.subr.mxu0 0.0
    %1056 = vmatpush1.msra.mxu0 %v941
    %1057 = vmatprep.subr.mxu0 0.0
    %1058 = vmatpush1.msra.mxu0 %v942
    %1059 = vmatprep.subr.mxu0 0.0
    %1060 = vmatpush1.msra.mxu0 %v943
    %1061 = vmatprep.subr.mxu0 0.0
    %1062 = vmatpush1.msra.mxu0 %v944
    %1063 = vmatprep.subr.mxu0 0.0
    %1064 = vmatpush1.msra.mxu0 %v945
    %1065 = vmatprep.subr.mxu0 0.0
    %1066 = vmatpush1.msra.mxu0 %v946
    %1067 = vmatprep.subr.mxu0 0.0
    %1068 = vmatpush1.msra.mxu0 %v947
    %1069 = vmatprep.subr.mxu0 0.0
    %1070 = vmatpush1.msra.mxu0 %v948
    %1071 = vmatprep.subr.mxu0 0.0
    %1072 = vmatpush1.msra.mxu0 %v949
    %1073 = vmatprep.subr.mxu0 0.0
    %1074 = vmatpush1.msra.mxu0 0.0
    %1075 = vmatprep.subr.mxu0 0.0
    %1076 = vmatpush1.msra.mxu0 0.0
    %1077 = vmatprep.subr.mxu0 0.0
    %1078 = vmatpush1.msra.mxu0 0.0
    %1079 = vmatprep.subr.mxu0 0.0
    %1080 = vmatpush1.msra.mxu0 0.0
    %1081 = vmatprep.subr.mxu0 0.0
    %1082 = vmatpush1.msra.mxu0 0.0
    %1083 = vmatprep.subr.mxu0 0.0
    %1084 = vmatpush1.msra.mxu0 0.0
    %1085 = vmatprep.subr.mxu0 0.0
    %1086 = vmatpush1.msra.mxu0 0.0
    %1087 = vmatprep.subr.mxu0 0.0
    %1088 = vmatpush1.msra.mxu0 0.0
    %1089 = vmatprep.subr.mxu0 0.0
    %1090 = vmatpush1.msra.mxu0 0.0
    %1091 = vmatprep.subr.mxu0 0.0
    %1092 = vmatpush1.msra.mxu0 0.0
    %1093 = vmatprep.subr.mxu0 0.0
    %1094 = vmatpush1.msra.mxu0 0.0
    %1095 = vmatprep.subr.mxu0 0.0
    %1096 = vmatpush1.msra.mxu0 0.0
    %1097 = vmatprep.subr.mxu0 0.0
    %1098 = vmatpush1.msra.mxu0 0.0
    %1099 = vmatprep.subr.mxu0 0.0
    %1100 = vmatpush1.msra.mxu0 0.0
    %1101 = vmatprep.subr.mxu0 0.0
    %1102 = vmatpush1.msra.mxu0 0.0
    %1103 = vmatprep.subr.mxu0 0.0
    %1104 = vmatpush1.msra.mxu0 0.0
    %1105 = vmatprep.mubr.f32.mxu0 0.0
    %1106 = vmatmul.mubr.f32.gmra.mrb[0].mxu0 %v525
    %v1107 = vpop.f32.mrb[0].mxu0
    %v1108 = vadd.f32 %v1033, %v1107
    %v1109 = vpop.f32.mrb[0].mxu0
    %1110 = vmatprep.mubr.f32.mxu0 0.0
    %1111 = vmatmul.mubr.f32.gmra.mrb[0].mxu0 %v530
    %v1112 = vpop.f32.mrb[0].mxu0
    %v1113 = vadd.f32 %v1038, %v1112
    %v1114 = vpop.f32.mrb[0].mxu0
    %1115 = vdwg.mxu0
    %v1116 = vld [vmem:[%s18] sm:$0x1]
    %v1118 = vlaneseq
    %v1119 = vshrl.u32 %v1118, 7
    %v1120 = vsub.s32 0, %v1119
    %v1121 = vrot.slane %v1116, %v1120
    %v1123 = vadd.f32 %v1108, %v1121
    %v1124 = vadd.f32 %v1113, %v1121
    %v1125 = vmax.f32 %v1123, 0.0
    %v1126 = vmax.f32 %v1124, 0.0
    %v1127 = vld [vmem:[#allocation17] sm:$0xff]
    %v1128 = vld [vmem:[#allocation17 + $0x8] sm:$0xff]
    %v1129 = vld [vmem:[#allocation17 + $0x10] sm:$0xff]
    %v1130 = vld [vmem:[#allocation17 + $0x18] sm:$0xff]
    %v1131 = vld [vmem:[#allocation17 + $0x20] sm:$0xff]
    %v1132 = vld [vmem:[#allocation17 + $0x28] sm:$0xff]
    %v1133 = vld [vmem:[#allocation17 + $0x30] sm:$0xff]
    %v1134 = vld [vmem:[#allocation17 + $0x38] sm:$0xff]
    %v1135 = vld [vmem:[#allocation17 + $0x40] sm:$0xff]
    %v1136 = vld [vmem:[#allocation17 + $0x48] sm:$0xff]
    %v1137 = vld [vmem:[#allocation17 + $0x50] sm:$0xff]
    %v1138 = vld [vmem:[#allocation17 + $0x58] sm:$0xff]
    %v1139 = vld [vmem:[#allocation17 + $0x60] sm:$0xff]
    %v1140 = vld [vmem:[#allocation17 + $0x68] sm:$0xff]
    %v1141 = vld [vmem:[#allocation17 + $0x70] sm:$0xff]
    %v1142 = vld [vmem:[#allocation17 + $0x78] sm:$0xff]
    %v1143 = vld [vmem:[%s20] sm:$0x1]
    %v1145 = vlaneseq
    %v1146 = vshrl.u32 %v1145, 7
    %v1147 = vsub.s32 0, %v1146
    %v1148 = vrot.slane %v1143, %v1147
    %1150 = vmatprep.subr.mxu0 0.0
    %1151 = vmatpush1.msra.mxu0 %v1127
    %1152 = vmatprep.subr.mxu0 0.0
    %1153 = vmatpush1.msra.mxu0 %v1128
    %1154 = vmatprep.subr.mxu0 0.0
    %1155 = vmatpush1.msra.mxu0 %v1129
    %1156 = vmatprep.subr.mxu0 0.0
    %1157 = vmatpush1.msra.mxu0 %v1130
    %1158 = vmatprep.subr.mxu0 0.0
    %1159 = vmatpush1.msra.mxu0 %v1131
    %1160 = vmatprep.subr.mxu0 0.0
    %1161 = vmatpush1.msra.mxu0 %v1132
    %1162 = vmatprep.subr.mxu0 0.0
    %1163 = vmatpush1.msra.mxu0 %v1133
    %1164 = vmatprep.subr.mxu0 0.0
    %1165 = vmatpush1.msra.mxu0 %v1134
    %1166 = vmatprep.subr.mxu0 0.0
    %1167 = vmatpush1.msra.mxu0 %v1135
    %1168 = vmatprep.subr.mxu0 0.0
    %1169 = vmatpush1.msra.mxu0 %v1136
    %1170 = vmatprep.subr.mxu0 0.0
    %1171 = vmatpush1.msra.mxu0 %v1137
    %1172 = vmatprep.subr.mxu0 0.0
    %1173 = vmatpush1.msra.mxu0 %v1138
    %1174 = vmatprep.subr.mxu0 0.0
    %1175 = vmatpush1.msra.mxu0 %v1139
    %1176 = vmatprep.subr.mxu0 0.0
    %1177 = vmatpush1.msra.mxu0 %v1140
    %1178 = vmatprep.subr.mxu0 0.0
    %1179 = vmatpush1.msra.mxu0 %v1141
    %1180 = vmatprep.subr.mxu0 0.0
    %1181 = vmatpush1.msra.mxu0 %v1142
    %1182 = vmatprep.subr.mxu0 0.0
    %1183 = vmatpush1.msra.mxu0 0.0
    %1184 = vmatprep.subr.mxu0 0.0
    %1185 = vmatpush1.msra.mxu0 0.0
    %1186 = vmatprep.subr.mxu0 0.0
    %1187 = vmatpush1.msra.mxu0 0.0
    %1188 = vmatprep.subr.mxu0 0.0
    %1189 = vmatpush1.msra.mxu0 0.0
    %1190 = vmatprep.subr.mxu0 0.0
    %1191 = vmatpush1.msra.mxu0 0.0
    %1192 = vmatprep.subr.mxu0 0.0
    %1193 = vmatpush1.msra.mxu0 0.0
    %1194 = vmatprep.subr.mxu0 0.0
    %1195 = vmatpush1.msra.mxu0 0.0
    %1196 = vmatprep.subr.mxu0 0.0
    %1197 = vmatpush1.msra.mxu0 0.0
    %1198 = vmatprep.subr.mxu0 0.0
    %1199 = vmatpush1.msra.mxu0 0.0
    %1200 = vmatprep.subr.mxu0 0.0
    %1201 = vmatpush1.msra.mxu0 0.0
    %1202 = vmatprep.subr.mxu0 0.0
    %1203 = vmatpush1.msra.mxu0 0.0
    %1204 = vmatprep.subr.mxu0 0.0
    %1205 = vmatpush1.msra.mxu0 0.0
    %1206 = vmatprep.subr.mxu0 0.0
    %1207 = vmatpush1.msra.mxu0 0.0
    %1208 = vmatprep.subr.mxu0 0.0
    %1209 = vmatpush1.msra.mxu0 0.0
    %1210 = vmatprep.subr.mxu0 0.0
    %1211 = vmatpush1.msra.mxu0 0.0
    %1212 = vmatprep.subr.mxu0 0.0
    %1213 = vmatpush1.msra.mxu0 0.0
    %1214 = vmatprep.mubr.f32.mxu0 0.0
    %1215 = vmatmul.mubr.f32.gmra.mrb[0].mxu0 %v1125
    %v1216 = vpop.f32.mrb[0].mxu0
    %v1217 = vadd.f32 %v1148, %v1216
    %v1218 = vpop.f32.mrb[0].mxu0
    %1219 = vmatprep.mubr.f32.mxu0 0.0
    %1220 = vmatmul.mubr.f32.gmra.mrb[0].mxu0 %v1126
    %v1221 = vpop.f32.mrb[0].mxu0
    %v1222 = vadd.f32 %v1148, %v1221
    %v1223 = vpop.f32.mrb[0].mxu0
    %1224 = vdwg.mxu0
    %v1225 = vand.u32 2147483647, %v1217
    %v1226 = vand.u32 2147483647, %v1222
    %1227 = vst [vmem:[%s26] sm:$0xff] %v1225
    %1228 = vst [vmem:[%s26 + $0x8] sm:$0xff] %v1226
    %v1229 = vld [vmem:[#allocation19] sm:$0xff]
    %v1230 = vld [vmem:[#allocation19 + $0x8] sm:$0xff]
    %v1231 = vld [vmem:[#allocation19 + $0x10] sm:$0xff]
    %v1232 = vld [vmem:[#allocation19 + $0x18] sm:$0xff]
    %v1233 = vld [vmem:[#allocation19 + $0x20] sm:$0xff]
    %v1234 = vld [vmem:[#allocation19 + $0x28] sm:$0xff]
    %v1235 = vld [vmem:[#allocation19 + $0x30] sm:$0xff]
    %v1236 = vld [vmem:[#allocation19 + $0x38] sm:$0xff]
    %v1237 = vld [vmem:[#allocation19 + $0x40] sm:$0xff]
    %v1238 = vld [vmem:[#allocation19 + $0x48] sm:$0xff]
    %v1239 = vld [vmem:[#allocation19 + $0x50] sm:$0xff]
    %v1240 = vld [vmem:[#allocation19 + $0x58] sm:$0xff]
    %v1241 = vld [vmem:[#allocation19 + $0x60] sm:$0xff]
    %v1242 = vld [vmem:[#allocation19 + $0x68] sm:$0xff]
    %v1243 = vld [vmem:[#allocation19 + $0x70] sm:$0xff]
    %v1244 = vld [vmem:[#allocation19 + $0x78] sm:$0xff]
    %v1245 = vld [vmem:[%s22] sm:$0x1]
    %v1247 = vlaneseq
    %v1248 = vshrl.u32 %v1247, 7
    %v1249 = vsub.s32 0, %v1248
    %v1250 = vrot.slane %v1245, %v1249
    %1252 = vmatprep.subr.mxu0 0.0
    %1253 = vmatpush1.msra.mxu0 %v1229
    %1254 = vmatprep.subr.mxu0 0.0
    %1255 = vmatpush1.msra.mxu0 %v1230
    %1256 = vmatprep.subr.mxu0 0.0
    %1257 = vmatpush1.msra.mxu0 %v1231
    %1258 = vmatprep.subr.mxu0 0.0
    %1259 = vmatpush1.msra.mxu0 %v1232
    %1260 = vmatprep.subr.mxu0 0.0
    %1261 = vmatpush1.msra.mxu0 %v1233
    %1262 = vmatprep.subr.mxu0 0.0
    %1263 = vmatpush1.msra.mxu0 %v1234
    %1264 = vmatprep.subr.mxu0 0.0
    %1265 = vmatpush1.msra.mxu0 %v1235
    %1266 = vmatprep.subr.mxu0 0.0
    %1267 = vmatpush1.msra.mxu0 %v1236
    %1268 = vmatprep.subr.mxu0 0.0
    %1269 = vmatpush1.msra.mxu0 %v1237
    %1270 = vmatprep.subr.mxu0 0.0
    %1271 = vmatpush1.msra.mxu0 %v1238
    %1272 = vmatprep.subr.mxu0 0.0
    %1273 = vmatpush1.msra.mxu0 %v1239
    %1274 = vmatprep.subr.mxu0 0.0
    %1275 = vmatpush1.msra.mxu0 %v1240
    %1276 = vmatprep.subr.mxu0 0.0
    %1277 = vmatpush1.msra.mxu0 %v1241
    %1278 = vmatprep.subr.mxu0 0.0
    %1279 = vmatpush1.msra.mxu0 %v1242
    %1280 = vmatprep.subr.mxu0 0.0
    %1281 = vmatpush1.msra.mxu0 %v1243
    %1282 = vmatprep.subr.mxu0 0.0
    %1283 = vmatpush1.msra.mxu0 %v1244
    %1284 = vmatprep.subr.mxu0 0.0
    %1285 = vmatpush1.msra.mxu0 0.0
    %1286 = vmatprep.subr.mxu0 0.0
    %1287 = vmatpush1.msra.mxu0 0.0
    %1288 = vmatprep.subr.mxu0 0.0
    %1289 = vmatpush1.msra.mxu0 0.0
    %1290 = vmatprep.subr.mxu0 0.0
    %1291 = vmatpush1.msra.mxu0 0.0
    %1292 = vmatprep.subr.mxu0 0.0
    %1293 = vmatpush1.msra.mxu0 0.0
    %1294 = vmatprep.subr.mxu0 0.0
    %1295 = vmatpush1.msra.mxu0 0.0
    %1296 = vmatprep.subr.mxu0 0.0
    %1297 = vmatpush1.msra.mxu0 0.0
    %1298 = vmatprep.subr.mxu0 0.0
    %1299 = vmatpush1.msra.mxu0 0.0
    %1300 = vmatprep.subr.mxu0 0.0
    %1301 = vmatpush1.msra.mxu0 0.0
    %1302 = vmatprep.subr.mxu0 0.0
    %1303 = vmatpush1.msra.mxu0 0.0
    %1304 = vmatprep.subr.mxu0 0.0
    %1305 = vmatpush1.msra.mxu0 0.0
    %1306 = vmatprep.subr.mxu0 0.0
    %1307 = vmatpush1.msra.mxu0 0.0
    %1308 = vmatprep.subr.mxu0 0.0
    %1309 = vmatpush1.msra.mxu0 0.0
    %1310 = vmatprep.subr.mxu0 0.0
    %1311 = vmatpush1.msra.mxu0 0.0
    %1312 = vmatprep.subr.mxu0 0.0
    %1313 = vmatpush1.msra.mxu0 0.0
    %1314 = vmatprep.subr.mxu0 0.0
    %1315 = vmatpush1.msra.mxu0 0.0
    %1316 = vmatprep.mubr.f32.mxu0 0.0
    %1317 = vmatmul.mubr.f32.gmra.mrb[0].mxu0 %v525
    %v1318 = vpop.f32.mrb[0].mxu0
    %v1319 = vadd.f32 %v1250, %v1318
    %v1320 = vpop.f32.mrb[0].mxu0
    %1321 = vmatprep.mubr.f32.mxu0 0.0
    %1322 = vmatmul.mubr.f32.gmra.mrb[0].mxu0 %v530
    %v1323 = vpop.f32.mrb[0].mxu0
    %v1324 = vadd.f32 %v1250, %v1323
    %v1325 = vpop.f32.mrb[0].mxu0
    %1326 = vdwg.mxu0
    %v1327 = vmax.f32 %v1319, 0.0
    %v1328 = vmax.f32 %v1324, 0.0
    %v1329 = vld [vmem:[%s23] sm:$0xff]
    %v1330 = vld [vmem:[%s23 + $0x8] sm:$0xff]
    %v1331 = vld [vmem:[%s23 + $0x10] sm:$0xff]
    %v1332 = vld [vmem:[%s23 + $0x18] sm:$0xff]
    %v1333 = vld [vmem:[%s23 + $0x20] sm:$0xff]
    %v1334 = vld [vmem:[%s23 + $0x28] sm:$0xff]
    %v1335 = vld [vmem:[%s23 + $0x30] sm:$0xff]
    %v1336 = vld [vmem:[%s23 + $0x38] sm:$0xff]
    %v1337 = vld [vmem:[%s23 + $0x40] sm:$0xff]
    %v1338 = vld [vmem:[%s23 + $0x48] sm:$0xff]
    %v1339 = vld [vmem:[%s23 + $0x50] sm:$0xff]
    %v1340 = vld [vmem:[%s23 + $0x58] sm:$0xff]
    %v1341 = vld [vmem:[%s23 + $0x60] sm:$0xff]
    %v1342 = vld [vmem:[%s23 + $0x68] sm:$0xff]
    %v1343 = vld [vmem:[%s23 + $0x70] sm:$0xff]
    %v1344 = vld [vmem:[%s23 + $0x78] sm:$0xff]
    %v1345 = vld [vmem:[%s24] sm:$0x1]
    %v1347 = vlaneseq
    %v1348 = vshrl.u32 %v1347, 7
    %v1349 = vsub.s32 0, %v1348
    %v1350 = vrot.slane %v1345, %v1349
    %1352 = vmatprep.subr.mxu0 0.0
    %1353 = vmatpush1.msra.mxu0 %v1329
    %1354 = vmatprep.subr.mxu0 0.0
    %1355 = vmatpush1.msra.mxu0 %v1330
    %1356 = vmatprep.subr.mxu0 0.0
    %1357 = vmatpush1.msra.mxu0 %v1331
    %1358 = vmatprep.subr.mxu0 0.0
    %1359 = vmatpush1.msra.mxu0 %v1332
    %1360 = vmatprep.subr.mxu0 0.0
    %1361 = vmatpush1.msra.mxu0 %v1333
    %1362 = vmatprep.subr.mxu0 0.0
    %1363 = vmatpush1.msra.mxu0 %v1334
    %1364 = vmatprep.subr.mxu0 0.0
    %1365 = vmatpush1.msra.mxu0 %v1335
    %1366 = vmatprep.subr.mxu0 0.0
    %1367 = vmatpush1.msra.mxu0 %v1336
    %1368 = vmatprep.subr.mxu0 0.0
    %1369 = vmatpush1.msra.mxu0 %v1337
    %1370 = vmatprep.subr.mxu0 0.0
    %1371 = vmatpush1.msra.mxu0 %v1338
    %1372 = vmatprep.subr.mxu0 0.0
    %1373 = vmatpush1.msra.mxu0 %v1339
    %1374 = vmatprep.subr.mxu0 0.0
    %1375 = vmatpush1.msra.mxu0 %v1340
    %1376 = vmatprep.subr.mxu0 0.0
    %1377 = vmatpush1.msra.mxu0 %v1341
    %1378 = vmatprep.subr.mxu0 0.0
    %1379 = vmatpush1.msra.mxu0 %v1342
    %1380 = vmatprep.subr.mxu0 0.0
    %1381 = vmatpush1.msra.mxu0 %v1343
    %1382 = vmatprep.subr.mxu0 0.0
    %1383 = vmatpush1.msra.mxu0 %v1344
    %1384 = vmatprep.subr.mxu0 0.0
    %1385 = vmatpush1.msra.mxu0 0.0
    %1386 = vmatprep.subr.mxu0 0.0
    %1387 = vmatpush1.msra.mxu0 0.0
    %1388 = vmatprep.subr.mxu0 0.0
    %1389 = vmatpush1.msra.mxu0 0.0
    %1390 = vmatprep.subr.mxu0 0.0
    %1391 = vmatpush1.msra.mxu0 0.0
    %1392 = vmatprep.subr.mxu0 0.0
    %1393 = vmatpush1.msra.mxu0 0.0
    %1394 = vmatprep.subr.mxu0 0.0
    %1395 = vmatpush1.msra.mxu0 0.0
    %1396 = vmatprep.subr.mxu0 0.0
    %1397 = vmatpush1.msra.mxu0 0.0
    %1398 = vmatprep.subr.mxu0 0.0
    %1399 = vmatpush1.msra.mxu0 0.0
    %1400 = vmatprep.subr.mxu0 0.0
    %1401 = vmatpush1.msra.mxu0 0.0
    %1402 = vmatprep.subr.mxu0 0.0
    %1403 = vmatpush1.msra.mxu0 0.0
    %1404 = vmatprep.subr.mxu0 0.0
    %1405 = vmatpush1.msra.mxu0 0.0
    %1406 = vmatprep.subr.mxu0 0.0
    %1407 = vmatpush1.msra.mxu0 0.0
    %1408 = vmatprep.subr.mxu0 0.0
    %1409 = vmatpush1.msra.mxu0 0.0
    %1410 = vmatprep.subr.mxu0 0.0
    %1411 = vmatpush1.msra.mxu0 0.0
    %1412 = vmatprep.subr.mxu0 0.0
    %1413 = vmatpush1.msra.mxu0 0.0
    %1414 = vmatprep.subr.mxu0 0.0
    %1415 = vmatpush1.msra.mxu0 0.0
    %1416 = vmatprep.mubr.f32.mxu0 0.0
    %1417 = vmatmul.mubr.f32.gmra.mrb[0].mxu0 %v1327
    %v1418 = vpop.f32.mrb[0].mxu0
    %v1419 = vadd.f32 %v1350, %v1418
    %v1420 = vpop.f32.mrb[0].mxu0
    %1421 = vmatprep.mubr.f32.mxu0 0.0
    %1422 = vmatmul.mubr.f32.gmra.mrb[0].mxu0 %v1328
    %v1423 = vpop.f32.mrb[0].mxu0
    %v1424 = vadd.f32 %v1350, %v1423
    %v1425 = vpop.f32.mrb[0].mxu0
    %1426 = vdwg.mxu0
    %v1427 = vand.u32 2147483647, %v1419
    %v1428 = vand.u32 2147483647, %v1424
    %1429 = vst [vmem:[%s27] sm:$0xff] %v1427
    %1430 = vst [vmem:[%s27 + $0x8] sm:$0xff] %v1428
    // Predicated region
    $region146: #{_lambda_.1} parent=1 // pred_check
      _
    $region147: #{_lambda_.1} parent=1 // pred_check_branch
      %1432 = sbr.rel (0) target = $region149
    $region148: #{_lambda_.1} parent=1 // pred_region
      _
    $region149: #{_lambda_.1} parent=1 // pred_fallthru
      _
    // Predicated region
    $region150: #{_lambda_.1} parent=1 // pred_check
      _
    $region151: #{_lambda_.1} parent=1 // pred_check_branch
      %1434 = sbr.rel (0) target = $region153
    $region152: #{_lambda_.1} parent=1 // pred_region
      _
    $region153: #{_lambda_.1} parent=1 // pred_fallthru
      _
    // Predicated region
    $region154: #{_lambda_.1} parent=1 // pred_check
      _
    $region155: #{_lambda_.1} parent=1 // pred_check_branch
      %1436 = sbr.rel (0) target = $region157
    $region156: #{_lambda_.1} parent=1 // pred_region
      _
    $region157: #{_lambda_.1} parent=1 // pred_fallthru
      _
    // Predicated region
    $region158: #{_lambda_.1} parent=1 // pred_check
      _
    $region159: #{_lambda_.1} parent=1 // pred_check_branch
      %1438 = sbr.rel (0) target = $region161
    $region160: #{_lambda_.1} parent=1 // pred_region
      _
    $region161: #{_lambda_.1} parent=1 // pred_fallthru
      _
    // Predicated region
    $region162: #{_lambda_.1} parent=1 // pred_check
      _
    $region163: #{_lambda_.1} parent=1 // pred_check_branch
      %1440 = sbr.rel (0) target = $region165
    $region164: #{_lambda_.1} parent=1 // pred_region
      _
    $region165: #{_lambda_.1} parent=1 // pred_fallthru
      _
    // Predicated region
    $region166: #{_lambda_.1} parent=1 // pred_check
      _
    $region167: #{_lambda_.1} parent=1 // pred_check_branch
      %1442 = sbr.rel (0) target = $region169
    $region168: #{_lambda_.1} parent=1 // pred_region
      _
    $region169: #{_lambda_.1} parent=1 // pred_fallthru
      _
    %1443 = vsyncpa [#allocation4], 1
    %1444 = vsyncpa [#allocation6], 1
    %1445 = vsyncpa [#allocation9], 1
    %1446 = vsyncpa [#allocation12], 1
    %1447 = vsyncpa [#allocation15], 1
    %1448 = vsyncpa [#allocation18], 1

</llo_original>
